<compile_context>
chip_gen: v6e
topology: v6e:2x2x1
jax: 0.10.0
libtpu: 0.0.40
codegen_flags: <defaults>
</compile_context>

<pallas_src>
import jax
import jax.numpy as jnp
from jax import lax
from jax.experimental import pallas as pl
from jax.experimental.pallas import tpu as pltpu

D_MODEL = 32
N_HEADS = 4
FF_UNITS = 128
HEAD_DIM = D_MODEL // N_HEADS
LN_EPS = 1e-5  # PyTorch nn.LayerNorm default


def _layernorm(x, w, b):
    mean = jnp.mean(x, axis=-1, keepdims=True)
    var = jnp.mean((x - mean) ** 2, axis=-1, keepdims=True)
    return (x - mean) * lax.rsqrt(var + LN_EPS) * w + b


def _to(a, dt):
    return a if a.dtype == dt else a.astype(dt)


def _make_kernel(mm_dtype, has_bias):
    """Kernel processing one (rows, E) slab (several sequences packed row-wise)."""

    def kernel(*refs):
        if has_bias:
            (x_ref, bias_ref,
             in_w_ref, in_b_ref, out_w_ref, out_b_ref,
             ln1_w_ref, ln1_b_ref, w1_ref, b1_ref, w2_ref, b2_ref,
             ln2_w_ref, ln2_b_ref, o_ref) = refs
        else:
            (x_ref,
             in_w_ref, in_b_ref, out_w_ref, out_b_ref,
             ln1_w_ref, ln1_b_ref, w1_ref, b1_ref, w2_ref, b2_ref,
             ln2_w_ref, ln2_b_ref, o_ref) = refs
            bias_ref = None

        x = x_ref[...]                                                # (rows, E) f32

        # ---- QKV projection: one batched matmul over every row in the block ----
        qkv = jnp.dot(_to(x, mm_dtype), in_w_ref[...],
                      preferred_element_type=jnp.float32) + in_b_ref[...]  # (rows, 3E)
        q = qkv[:, :D_MODEL]                  # 1/sqrt(head_dim) pre-folded into W_q
        v = qkv[:, 2 * D_MODEL:]
        # One transpose for all heads; per-head K^T is then a free sublane slice.
        kT = qkv[:, D_MODEL:2 * D_MODEL].T                            # (E, rows) f32

        bias = bias_ref[...] if has_bias else None   # block-diag mask from host VMEM

        # ---- Self-attention: per-head scores, heads packed before out_proj ----
        pvs = []
        for h in range(N_HEADS):                        # static 4-way unroll
            sl = slice(h * HEAD_DIM, (h + 1) * HEAD_DIM)
            qh = _to(q[:, sl], mm_dtype)                # small lane extracts overlap
            kh = _to(kT[sl, :], mm_dtype)               # with MXU pushes (XLU slot)
            s = jnp.dot(qh, kh, preferred_element_type=jnp.float32)   # (rows, rows)
            if bias is not None:
                s = s + bias                            # -1e30 off-sequence, f32-safe
            s = s - jnp.max(s, axis=-1, keepdims=True)
            p = jnp.exp(s)
            denom = jnp.sum(p, axis=-1, keepdims=True)
            # EUP approximate reciprocal + one Newton step (no VALU divide).
            r = pl.reciprocal(denom, approx=True)
            r = r * (2.0 - denom * r)
            pvs.append(jnp.dot(_to(p * r, mm_dtype), _to(v[:, sl], mm_dtype),
                               preferred_element_type=jnp.float32))   # (rows, dh)

        # Pack heads -> ONE K=32 output-projection matmul (no per-head accumulate).
        pv = jnp.concatenate(pvs, axis=-1)                            # (rows, E)
        attn = jnp.dot(_to(pv, mm_dtype), out_w_ref[...],
                       preferred_element_type=jnp.float32) + out_b_ref[...]

        # dropout(p=0.1) is identity in the eval-mode forward
        x1 = _layernorm(x + attn, ln1_w_ref[...], ln1_b_ref[...])

        # ---- Feed-forward: (rows, 128) hidden is lane-dense ------------------
        h1 = jnp.dot(_to(x1, mm_dtype), w1_ref[...],
                     preferred_element_type=jnp.float32) + b1_ref[...]
        h1 = jnp.maximum(h1, 0.0)
        ffn = jnp.dot(_to(h1, mm_dtype), w2_ref[...],
                      preferred_element_type=jnp.float32) + b2_ref[...]

        o_ref[...] = _layernorm(x1 + ffn, ln2_w_ref[...], ln2_b_ref[...]).astype(o_ref.dtype)

    return kernel


def prepare_params(params, matmul_dtype=jnp.bfloat16):
    """One-time transform of PyTorch-style params into the kernel layout.

    Folds the 1/sqrt(head_dim) q-scaling into in_proj weight/bias and
    pre-transposes all weights.  matmul_dtype defaults to bfloat16 (MXU-native on
    v5e/v6e/v7x; f32 accumulation is kept in-kernel); pass jnp.float32 for strict
    parity with the f32 PyTorch reference.
    """
    scale = HEAD_DIM ** -0.5
    col_scale = jnp.concatenate([jnp.full((D_MODEL,), scale, jnp.float32),
                                 jnp.ones((2 * D_MODEL,), jnp.float32)])
    in_w = params["in_proj_w"].T * col_scale[None, :]
    in_b = (params["in_proj_b"] * col_scale)[None, :]
    f32 = jnp.float32
    return {
        "in_w": in_w.astype(matmul_dtype),
        "in_b": in_b.astype(f32),
        "out_w": params["out_proj_w"].T.astype(matmul_dtype),
        "out_b": params["out_proj_b"][None, :].astype(f32),
        "ln1_w": params["ln1_w"][None, :].astype(f32),
        "ln1_b": params["ln1_b"][None, :].astype(f32),
        "w1": params["ffn_w1"].T.astype(matmul_dtype),
        "b1": params["ffn_b1"][None, :].astype(f32),
        "w2": params["ffn_w2"].T.astype(matmul_dtype),
        "b2": params["ffn_b2"][None, :].astype(f32),
        "ln2_w": params["ln2_w"][None, :].astype(f32),
        "ln2_b": params["ln2_b"][None, :].astype(f32),
    }


def transformer_block(x, prep, seqs_per_block=None, target_rows=64):
    """x: (L, N, E) float32; prep: prepare_params(...) output. Returns (L, N, E)."""
    L, N, E = x.shape
    assert E == D_MODEL

    # Batch-major, rows grouped by sequence: row index = n*L + l.
    xb = jnp.transpose(x, (1, 0, 2)).reshape(N * L, E)

    if seqs_per_block is None:
        # ~64 rows/step: amortizes the ~600-cycle per-step overhead while keeping
        # the rows^2 block-diagonal softmax waste 4x lower than a 128-row block.
        S = max(1, min(target_rows // max(L, 1), N))
        if N > 1:
            S = min(S, -(-N // 2))      # grid >= 2 -> both v7x TensorCores get work
    else:
        S = max(1, min(seqs_per_block, N))
    while N % S:
        S -= 1
    if (S * L) % 8 and S != N:
        S = N                           # full-slab fallback keeps (8,128) tiling legal
    rows = S * L
    grid = (N // S,)

    mm_dtype = prep["in_w"].dtype
    has_bias = S > 1
    kernel = _make_kernel(mm_dtype, has_bias)

    weights = (prep["in_w"], prep["in_b"], prep["out_w"], prep["out_b"],
               prep["ln1_w"], prep["ln1_b"], prep["w1"], prep["b1"],
               prep["w2"], prep["b2"], prep["ln2_w"], prep["ln2_b"])

    def full_spec(a):
        return pl.BlockSpec(a.shape, lambda b: (0,) * a.ndim)  # grid-invariant

    args = [xb]
    in_specs = [pl.BlockSpec((rows, E), lambda b: (b, 0))]
    if has_bias:
        # Block-diagonal attention mask, built once on the host (not per step).
        seq = jnp.arange(rows, dtype=jnp.int32) // L
        bias = jnp.where(seq[:, None] == seq[None, :], 0.0, -1e30).astype(jnp.float32)
        args.append(bias)
        in_specs.append(full_spec(bias))
    args.extend(weights)
    in_specs.extend(full_spec(a) for a in weights)

    out2d = pl.pallas_call(
        kernel,
        out_shape=jax.ShapeDtypeStruct((N * L, E), x.dtype),
        grid_spec=pltpu.PrefetchScalarGridSpec(
            num_scalar_prefetch=0,
            grid=grid,
            in_specs=in_specs,
            out_specs=pl.BlockSpec((rows, E), lambda b: (b, 0)),
        ),
        compiler_params=pltpu.CompilerParams(
            dimension_semantics=("parallel",)),
    )(*args)

    return jnp.transpose(out2d.reshape(N, L, E), (1, 0, 2))


# ----------------------------- pure-JAX reference --------------------------
def transformer_block_ref(x, p):
    L, N, E = x.shape
    out = []
    for n in range(N):
        xi = x[:, n, :]
        qkv = xi @ p["in_proj_w"].T + p["in_proj_b"]
        q = qkv[:, :E] * (HEAD_DIM ** -0.5)
        k = qkv[:, E:2 * E]
        v = qkv[:, 2 * E:]
        heads = []
        for h in range(N_HEADS):
            sl = slice(h * HEAD_DIM, (h + 1) * HEAD_DIM)
            s = q[:, sl] @ k[:, sl].T
            pr = jax.nn.softmax(s, axis=-1)
            heads.append(pr @ v[:, sl])
        attn = jnp.concatenate(heads, axis=-1) @ p["out_proj_w"].T + p["out_proj_b"]
        x1 = _layernorm(xi + attn, p["ln1_w"], p["ln1_b"])
        ffn = jnp.maximum(x1 @ p["ffn_w1"].T + p["ffn_b1"], 0.0) @ p["ffn_w2"].T + p["ffn_b2"]
        out.append(_layernorm(x1 + ffn, p["ln2_w"], p["ln2_b"]))
    return jnp.stack(out, axis=1)


def init_params(key):
    ks = jax.random.split(key, 6)
    s = 0.05
    return {
        "in_proj_w":  s * jax.random.normal(ks[0], (3 * D_MODEL, D_MODEL), jnp.float32),
        "in_proj_b":  jnp.zeros((3 * D_MODEL,), jnp.float32),
        "out_proj_w": s * jax.random.normal(ks[1], (D_MODEL, D_MODEL), jnp.float32),
        "out_proj_b": jnp.zeros((D_MODEL,), jnp.float32),
        "ln1_w": jnp.ones((D_MODEL,), jnp.float32),
        "ln1_b": jnp.zeros((D_MODEL,), jnp.float32),
        "ffn_w1": s * jax.random.normal(ks[2], (FF_UNITS, D_MODEL), jnp.float32),
        "ffn_b1": s * jax.random.normal(ks[3], (FF_UNITS,), jnp.float32),
        "ffn_w2": s * jax.random.normal(ks[4], (D_MODEL, FF_UNITS), jnp.float32),
        "ffn_b2": s * jax.random.normal(ks[5], (D_MODEL,), jnp.float32),
        "ln2_w": jnp.ones((D_MODEL,), jnp.float32),
        "ln2_b": jnp.zeros((D_MODEL,), jnp.float32),
    }


if __name__ == "__main__":
    key = jax.random.PRNGKey(0)
    kx, kp = jax.random.split(key)
    params = init_params(kp)

    # ---- default (bf16 matmul operands, f32 accumulation); L=8, N=2 ----------
    L, N = 8, 2
    x = jax.random.normal(kx, (L, N, D_MODEL), jnp.float32)
    prep_bf16 = prepare_params(params)               # bf16 operands (default)
    y = jax.block_until_ready(transformer_block(x, prep_bf16))
    y_ref = transformer_block_ref(x, params)
    assert y.shape == (L, N, D_MODEL)
    assert jnp.allclose(y, y_ref, atol=2e-2, rtol=2e-2), "bf16 mismatch vs JAX reference"

    # ---- strict f32 parity on a larger batch (exercises the block-diag bias) --
    L2, N2 = 8, 8
    x2 = jax.random.normal(jax.random.PRNGKey(1), (L2, N2, D_MODEL), jnp.float32)
    prep_f32 = prepare_params(params, matmul_dtype=jnp.float32)
    y2 = jax.block_until_ready(transformer_block(x2, prep_f32))
    y2_ref = transformer_block_ref(x2, params)
    assert jnp.allclose(y2, y2_ref, atol=1e-4, rtol=1e-4), "f32 mismatch vs JAX reference"

    print("KERNEL_OK")
</pallas_src>

<mosaic_0001>
module attributes {stable_mosaic.version = 11 : i64} {
  func.func @kernel(%arg0: i32, %arg1: memref<8x32xf32, #tpu.memory_space<vmem>>, %arg2: memref<32x96xbf16, #tpu.memory_space<vmem>>, %arg3: memref<1x96xf32, #tpu.memory_space<vmem>>, %arg4: memref<32x32xbf16, #tpu.memory_space<vmem>>, %arg5: memref<1x32xf32, #tpu.memory_space<vmem>>, %arg6: memref<1x32xf32, #tpu.memory_space<vmem>>, %arg7: memref<1x32xf32, #tpu.memory_space<vmem>>, %arg8: memref<32x128xbf16, #tpu.memory_space<vmem>>, %arg9: memref<1x128xf32, #tpu.memory_space<vmem>>, %arg10: memref<128x32xbf16, #tpu.memory_space<vmem>>, %arg11: memref<1x32xf32, #tpu.memory_space<vmem>>, %arg12: memref<1x32xf32, #tpu.memory_space<vmem>>, %arg13: memref<1x32xf32, #tpu.memory_space<vmem>>, %arg14: memref<8x32xf32, #tpu.memory_space<vmem>>) attributes {dimension_semantics = [#tpu.dimension_semantics<parallel>], iteration_bounds = array<i64: 2>, scalar_prefetch = 0 : i64, scratch_operands = 0 : i64, tpu.core_type = #tpu.core_type<tc>, window_params = [{transform_indices = @transform_0, window_bounds = array<i64: 8, 32>}, {pipeline_mode = #tpu.pipeline_mode<synchronous>, transform_indices = @transform_1, window_bounds = array<i64: 32, 96>}, {pipeline_mode = #tpu.pipeline_mode<synchronous>, transform_indices = @transform_2, window_bounds = array<i64: 1, 96>}, {pipeline_mode = #tpu.pipeline_mode<synchronous>, transform_indices = @transform_3, window_bounds = array<i64: 32, 32>}, {pipeline_mode = #tpu.pipeline_mode<synchronous>, transform_indices = @transform_4, window_bounds = array<i64: 1, 32>}, {pipeline_mode = #tpu.pipeline_mode<synchronous>, transform_indices = @transform_5, window_bounds = array<i64: 1, 32>}, {pipeline_mode = #tpu.pipeline_mode<synchronous>, transform_indices = @transform_6, window_bounds = array<i64: 1, 32>}, {pipeline_mode = #tpu.pipeline_mode<synchronous>, transform_indices = @transform_7, window_bounds = array<i64: 32, 128>}, {pipeline_mode = #tpu.pipeline_mode<synchronous>, transform_indices = @transform_8, window_bounds = array<i64: 1, 128>}, {pipeline_mode = #tpu.pipeline_mode<synchronous>, transform_indices = @transform_9, window_bounds = array<i64: 128, 32>}, {pipeline_mode = #tpu.pipeline_mode<synchronous>, transform_indices = @transform_10, window_bounds = array<i64: 1, 32>}, {pipeline_mode = #tpu.pipeline_mode<synchronous>, transform_indices = @transform_11, window_bounds = array<i64: 1, 32>}, {pipeline_mode = #tpu.pipeline_mode<synchronous>, transform_indices = @transform_12, window_bounds = array<i64: 1, 32>}, {transform_indices = @transform_13, window_bounds = array<i64: 8, 32>}]} {
    %c0 = arith.constant 0 : index
    %c0_0 = arith.constant 0 : index
    %0 = vector.load %arg1[%c0, %c0_0] : memref<8x32xf32, #tpu.memory_space<vmem>>, vector<8x32xf32>
    %1 = arith.truncf %0 : vector<8x32xf32> to vector<8x32xbf16>
    %c0_1 = arith.constant 0 : index
    %c0_2 = arith.constant 0 : index
    %2 = vector.load %arg2[%c0_1, %c0_2] : memref<32x96xbf16, #tpu.memory_space<vmem>>, vector<32x96xbf16>
    %cst = arith.constant dense<0.000000e+00> : vector<8x96xf32>
    %3 = tpu.matmul %1, %2, %cst {dimension_numbers = #tpu.dot_dimension_numbers<[1], [0], [0], [1], [0, 0, 1, 1], [], []>} : vector<8x32xbf16>, vector<32x96xbf16>, vector<8x96xf32> -> vector<8x96xf32>
    %c0_3 = arith.constant 0 : index
    %c0_4 = arith.constant 0 : index
    %4 = vector.load %arg3[%c0_3, %c0_4] : memref<1x96xf32, #tpu.memory_space<vmem>>, vector<1x96xf32>
    %5 = vector.broadcast %4 : vector<1x96xf32> to vector<8x96xf32>
    %6 = arith.addf %3, %5 : vector<8x96xf32>
    %7 = vector.extract_strided_slice %6 {offsets = [0, 0], sizes = [8, 32], strides = [1, 1]} : vector<8x96xf32> to vector<8x32xf32>
    %8 = vector.extract_strided_slice %6 {offsets = [0, 64], sizes = [8, 32], strides = [1, 1]} : vector<8x96xf32> to vector<8x32xf32>
    %9 = vector.extract_strided_slice %6 {offsets = [0, 32], sizes = [8, 32], strides = [1, 1]} : vector<8x96xf32> to vector<8x32xf32>
    %10 = tpu.transpose %9, [1, 0] : vector<8x32xf32> -> vector<32x8xf32>
    %11 = vector.extract_strided_slice %7 {offsets = [0, 0], sizes = [8, 8], strides = [1, 1]} : vector<8x32xf32> to vector<8x8xf32>
    %12 = arith.truncf %11 : vector<8x8xf32> to vector<8x8xbf16>
    %13 = vector.extract_strided_slice %10 {offsets = [0, 0], sizes = [8, 8], strides = [1, 1]} : vector<32x8xf32> to vector<8x8xf32>
    %14 = arith.truncf %13 : vector<8x8xf32> to vector<8x8xbf16>
    %cst_5 = arith.constant dense<0.000000e+00> : vector<8x8xf32>
    %15 = tpu.matmul %12, %14, %cst_5 {dimension_numbers = #tpu.dot_dimension_numbers<[1], [0], [0], [1], [0, 0, 1, 1], [], []>} : vector<8x8xbf16>, vector<8x8xbf16>, vector<8x8xf32> -> vector<8x8xf32>
    %cst_6 = arith.constant dense<0xFF800000> : vector<8xf32>
    %16 = vector.multi_reduction <maximumf>, %15, %cst_6 [1] : vector<8x8xf32> to vector<8xf32>
    %17 = vector.shape_cast %16 : vector<8xf32> to vector<8x1xf32>
    %18 = vector.broadcast %17 : vector<8x1xf32> to vector<8x8xf32>
    %19 = arith.subf %15, %18 : vector<8x8xf32>
    %20 = math.exp %19 : vector<8x8xf32>
    %cst_7 = arith.constant dense<0.000000e+00> : vector<8xf32>
    %21 = vector.multi_reduction <add>, %20, %cst_7 [1] : vector<8x8xf32> to vector<8xf32>
    %22 = vector.shape_cast %21 : vector<8xf32> to vector<8x1xf32>
    %23 = tpu.reciprocal %22 {approx = true} : vector<8x1xf32> -> vector<8x1xf32>
    %24 = arith.mulf %22, %23 : vector<8x1xf32>
    %cst_8 = arith.constant 2.000000e+00 : f32
    %25 = vector.broadcast %cst_8 : f32 to vector<8x1xf32>
    %26 = arith.subf %25, %24 : vector<8x1xf32>
    %27 = arith.mulf %23, %26 : vector<8x1xf32>
    %28 = vector.broadcast %27 : vector<8x1xf32> to vector<8x8xf32>
    %29 = arith.mulf %20, %28 : vector<8x8xf32>
    %30 = arith.truncf %29 : vector<8x8xf32> to vector<8x8xbf16>
    %31 = vector.extract_strided_slice %8 {offsets = [0, 0], sizes = [8, 8], strides = [1, 1]} : vector<8x32xf32> to vector<8x8xf32>
    %32 = arith.truncf %31 : vector<8x8xf32> to vector<8x8xbf16>
    %cst_9 = arith.constant dense<0.000000e+00> : vector<8x8xf32>
    %33 = tpu.matmul %30, %32, %cst_9 {dimension_numbers = #tpu.dot_dimension_numbers<[1], [0], [0], [1], [0, 0, 1, 1], [], []>} : vector<8x8xbf16>, vector<8x8xbf16>, vector<8x8xf32> -> vector<8x8xf32>
    %34 = vector.extract_strided_slice %7 {offsets = [0, 8], sizes = [8, 8], strides = [1, 1]} : vector<8x32xf32> to vector<8x8xf32>
    %35 = arith.truncf %34 : vector<8x8xf32> to vector<8x8xbf16>
    %36 = vector.extract_strided_slice %10 {offsets = [8, 0], sizes = [8, 8], strides = [1, 1]} : vector<32x8xf32> to vector<8x8xf32>
    %37 = arith.truncf %36 : vector<8x8xf32> to vector<8x8xbf16>
    %cst_10 = arith.constant dense<0.000000e+00> : vector<8x8xf32>
    %38 = tpu.matmul %35, %37, %cst_10 {dimension_numbers = #tpu.dot_dimension_numbers<[1], [0], [0], [1], [0, 0, 1, 1], [], []>} : vector<8x8xbf16>, vector<8x8xbf16>, vector<8x8xf32> -> vector<8x8xf32>
    %cst_11 = arith.constant dense<0xFF800000> : vector<8xf32>
    %39 = vector.multi_reduction <maximumf>, %38, %cst_11 [1] : vector<8x8xf32> to vector<8xf32>
    %40 = vector.shape_cast %39 : vector<8xf32> to vector<8x1xf32>
    %41 = vector.broadcast %40 : vector<8x1xf32> to vector<8x8xf32>
    %42 = arith.subf %38, %41 : vector<8x8xf32>
    %43 = math.exp %42 : vector<8x8xf32>
    %cst_12 = arith.constant dense<0.000000e+00> : vector<8xf32>
    %44 = vector.multi_reduction <add>, %43, %cst_12 [1] : vector<8x8xf32> to vector<8xf32>
    %45 = vector.shape_cast %44 : vector<8xf32> to vector<8x1xf32>
    %46 = tpu.reciprocal %45 {approx = true} : vector<8x1xf32> -> vector<8x1xf32>
    %47 = arith.mulf %45, %46 : vector<8x1xf32>
    %cst_13 = arith.constant 2.000000e+00 : f32
    %48 = vector.broadcast %cst_13 : f32 to vector<8x1xf32>
    %49 = arith.subf %48, %47 : vector<8x1xf32>
    %50 = arith.mulf %46, %49 : vector<8x1xf32>
    %51 = vector.broadcast %50 : vector<8x1xf32> to vector<8x8xf32>
    %52 = arith.mulf %43, %51 : vector<8x8xf32>
    %53 = arith.truncf %52 : vector<8x8xf32> to vector<8x8xbf16>
    %54 = vector.extract_strided_slice %8 {offsets = [0, 8], sizes = [8, 8], strides = [1, 1]} : vector<8x32xf32> to vector<8x8xf32>
    %55 = arith.truncf %54 : vector<8x8xf32> to vector<8x8xbf16>
    %cst_14 = arith.constant dense<0.000000e+00> : vector<8x8xf32>
    %56 = tpu.matmul %53, %55, %cst_14 {dimension_numbers = #tpu.dot_dimension_numbers<[1], [0], [0], [1], [0, 0, 1, 1], [], []>} : vector<8x8xbf16>, vector<8x8xbf16>, vector<8x8xf32> -> vector<8x8xf32>
    %57 = vector.extract_strided_slice %7 {offsets = [0, 16], sizes = [8, 8], strides = [1, 1]} : vector<8x32xf32> to vector<8x8xf32>
    %58 = arith.truncf %57 : vector<8x8xf32> to vector<8x8xbf16>
    %59 = vector.extract_strided_slice %10 {offsets = [16, 0], sizes = [8, 8], strides = [1, 1]} : vector<32x8xf32> to vector<8x8xf32>
    %60 = arith.truncf %59 : vector<8x8xf32> to vector<8x8xbf16>
    %cst_15 = arith.constant dense<0.000000e+00> : vector<8x8xf32>
    %61 = tpu.matmul %58, %60, %cst_15 {dimension_numbers = #tpu.dot_dimension_numbers<[1], [0], [0], [1], [0, 0, 1, 1], [], []>} : vector<8x8xbf16>, vector<8x8xbf16>, vector<8x8xf32> -> vector<8x8xf32>
    %cst_16 = arith.constant dense<0xFF800000> : vector<8xf32>
    %62 = vector.multi_reduction <maximumf>, %61, %cst_16 [1] : vector<8x8xf32> to vector<8xf32>
    %63 = vector.shape_cast %62 : vector<8xf32> to vector<8x1xf32>
    %64 = vector.broadcast %63 : vector<8x1xf32> to vector<8x8xf32>
    %65 = arith.subf %61, %64 : vector<8x8xf32>
    %66 = math.exp %65 : vector<8x8xf32>
    %cst_17 = arith.constant dense<0.000000e+00> : vector<8xf32>
    %67 = vector.multi_reduction <add>, %66, %cst_17 [1] : vector<8x8xf32> to vector<8xf32>
    %68 = vector.shape_cast %67 : vector<8xf32> to vector<8x1xf32>
    %69 = tpu.reciprocal %68 {approx = true} : vector<8x1xf32> -> vector<8x1xf32>
    %70 = arith.mulf %68, %69 : vector<8x1xf32>
    %cst_18 = arith.constant 2.000000e+00 : f32
    %71 = vector.broadcast %cst_18 : f32 to vector<8x1xf32>
    %72 = arith.subf %71, %70 : vector<8x1xf32>
    %73 = arith.mulf %69, %72 : vector<8x1xf32>
    %74 = vector.broadcast %73 : vector<8x1xf32> to vector<8x8xf32>
    %75 = arith.mulf %66, %74 : vector<8x8xf32>
    %76 = arith.truncf %75 : vector<8x8xf32> to vector<8x8xbf16>
    %77 = vector.extract_strided_slice %8 {offsets = [0, 16], sizes = [8, 8], strides = [1, 1]} : vector<8x32xf32> to vector<8x8xf32>
    %78 = arith.truncf %77 : vector<8x8xf32> to vector<8x8xbf16>
    %cst_19 = arith.constant dense<0.000000e+00> : vector<8x8xf32>
    %79 = tpu.matmul %76, %78, %cst_19 {dimension_numbers = #tpu.dot_dimension_numbers<[1], [0], [0], [1], [0, 0, 1, 1], [], []>} : vector<8x8xbf16>, vector<8x8xbf16>, vector<8x8xf32> -> vector<8x8xf32>
    %80 = vector.extract_strided_slice %7 {offsets = [0, 24], sizes = [8, 8], strides = [1, 1]} : vector<8x32xf32> to vector<8x8xf32>
    %81 = arith.truncf %80 : vector<8x8xf32> to vector<8x8xbf16>
    %82 = vector.extract_strided_slice %10 {offsets = [24, 0], sizes = [8, 8], strides = [1, 1]} : vector<32x8xf32> to vector<8x8xf32>
    %83 = arith.truncf %82 : vector<8x8xf32> to vector<8x8xbf16>
    %cst_20 = arith.constant dense<0.000000e+00> : vector<8x8xf32>
    %84 = tpu.matmul %81, %83, %cst_20 {dimension_numbers = #tpu.dot_dimension_numbers<[1], [0], [0], [1], [0, 0, 1, 1], [], []>} : vector<8x8xbf16>, vector<8x8xbf16>, vector<8x8xf32> -> vector<8x8xf32>
    %cst_21 = arith.constant dense<0xFF800000> : vector<8xf32>
    %85 = vector.multi_reduction <maximumf>, %84, %cst_21 [1] : vector<8x8xf32> to vector<8xf32>
    %86 = vector.shape_cast %85 : vector<8xf32> to vector<8x1xf32>
    %87 = vector.broadcast %86 : vector<8x1xf32> to vector<8x8xf32>
    %88 = arith.subf %84, %87 : vector<8x8xf32>
    %89 = math.exp %88 : vector<8x8xf32>
    %cst_22 = arith.constant dense<0.000000e+00> : vector<8xf32>
    %90 = vector.multi_reduction <add>, %89, %cst_22 [1] : vector<8x8xf32> to vector<8xf32>
    %91 = vector.shape_cast %90 : vector<8xf32> to vector<8x1xf32>
    %92 = tpu.reciprocal %91 {approx = true} : vector<8x1xf32> -> vector<8x1xf32>
    %93 = arith.mulf %91, %92 : vector<8x1xf32>
    %cst_23 = arith.constant 2.000000e+00 : f32
    %94 = vector.broadcast %cst_23 : f32 to vector<8x1xf32>
    %95 = arith.subf %94, %93 : vector<8x1xf32>
    %96 = arith.mulf %92, %95 : vector<8x1xf32>
    %97 = vector.broadcast %96 : vector<8x1xf32> to vector<8x8xf32>
    %98 = arith.mulf %89, %97 : vector<8x8xf32>
    %99 = arith.truncf %98 : vector<8x8xf32> to vector<8x8xbf16>
    %100 = vector.extract_strided_slice %8 {offsets = [0, 24], sizes = [8, 8], strides = [1, 1]} : vector<8x32xf32> to vector<8x8xf32>
    %101 = arith.truncf %100 : vector<8x8xf32> to vector<8x8xbf16>
    %cst_24 = arith.constant dense<0.000000e+00> : vector<8x8xf32>
    %102 = tpu.matmul %99, %101, %cst_24 {dimension_numbers = #tpu.dot_dimension_numbers<[1], [0], [0], [1], [0, 0, 1, 1], [], []>} : vector<8x8xbf16>, vector<8x8xbf16>, vector<8x8xf32> -> vector<8x8xf32>
    %103 = tpu.concatenate %33, %56, %79, %102 in 1 : vector<8x8xf32>, vector<8x8xf32>, vector<8x8xf32>, vector<8x8xf32> -> vector<8x32xf32>
    %104 = arith.truncf %103 : vector<8x32xf32> to vector<8x32xbf16>
    %c0_25 = arith.constant 0 : index
    %c0_26 = arith.constant 0 : index
    %105 = vector.load %arg4[%c0_25, %c0_26] : memref<32x32xbf16, #tpu.memory_space<vmem>>, vector<32x32xbf16>
    %cst_27 = arith.constant dense<0.000000e+00> : vector<8x32xf32>
    %106 = tpu.matmul %104, %105, %cst_27 {dimension_numbers = #tpu.dot_dimension_numbers<[1], [0], [0], [1], [0, 0, 1, 1], [], []>} : vector<8x32xbf16>, vector<32x32xbf16>, vector<8x32xf32> -> vector<8x32xf32>
    %c0_28 = arith.constant 0 : index
    %c0_29 = arith.constant 0 : index
    %107 = vector.load %arg5[%c0_28, %c0_29] : memref<1x32xf32, #tpu.memory_space<vmem>>, vector<1x32xf32>
    %108 = vector.broadcast %107 : vector<1x32xf32> to vector<8x32xf32>
    %109 = arith.addf %106, %108 : vector<8x32xf32>
    %110 = arith.addf %0, %109 : vector<8x32xf32>
    %c0_30 = arith.constant 0 : index
    %c0_31 = arith.constant 0 : index
    %111 = vector.load %arg6[%c0_30, %c0_31] : memref<1x32xf32, #tpu.memory_space<vmem>>, vector<1x32xf32>
    %c0_32 = arith.constant 0 : index
    %c0_33 = arith.constant 0 : index
    %112 = vector.load %arg7[%c0_32, %c0_33] : memref<1x32xf32, #tpu.memory_space<vmem>>, vector<1x32xf32>
    %cst_34 = arith.constant dense<0.000000e+00> : vector<8xf32>
    %113 = vector.multi_reduction <add>, %110, %cst_34 [1] : vector<8x32xf32> to vector<8xf32>
    %114 = vector.shape_cast %113 : vector<8xf32> to vector<8x1xf32>
    %cst_35 = arith.constant 3.200000e+01 : f32
    %115 = vector.broadcast %cst_35 : f32 to vector<8x1xf32>
    %116 = arith.divf %114, %115 : vector<8x1xf32>
    %117 = vector.broadcast %116 : vector<8x1xf32> to vector<8x32xf32>
    %118 = arith.subf %110, %117 : vector<8x32xf32>
    %119 = arith.mulf %118, %118 : vector<8x32xf32>
    %cst_36 = arith.constant dense<0.000000e+00> : vector<8xf32>
    %120 = vector.multi_reduction <add>, %119, %cst_36 [1] : vector<8x32xf32> to vector<8xf32>
    %121 = vector.shape_cast %120 : vector<8xf32> to vector<8x1xf32>
    %cst_37 = arith.constant 3.200000e+01 : f32
    %122 = vector.broadcast %cst_37 : f32 to vector<8x1xf32>
    %123 = arith.divf %121, %122 : vector<8x1xf32>
    %124 = vector.broadcast %116 : vector<8x1xf32> to vector<8x32xf32>
    %125 = arith.subf %110, %124 : vector<8x32xf32>
    %cst_38 = arith.constant 9.99999974E-6 : f32
    %126 = vector.broadcast %cst_38 : f32 to vector<8x1xf32>
    %127 = arith.addf %123, %126 : vector<8x1xf32>
    %128 = math.rsqrt %127 : vector<8x1xf32>
    %129 = vector.broadcast %128 : vector<8x1xf32> to vector<8x32xf32>
    %130 = arith.mulf %125, %129 : vector<8x32xf32>
    %131 = vector.broadcast %111 : vector<1x32xf32> to vector<8x32xf32>
    %132 = arith.mulf %130, %131 : vector<8x32xf32>
    %133 = vector.broadcast %112 : vector<1x32xf32> to vector<8x32xf32>
    %134 = arith.addf %132, %133 : vector<8x32xf32>
    %135 = arith.truncf %134 : vector<8x32xf32> to vector<8x32xbf16>
    %c0_39 = arith.constant 0 : index
    %c0_40 = arith.constant 0 : index
    %136 = vector.load %arg8[%c0_39, %c0_40] : memref<32x128xbf16, #tpu.memory_space<vmem>>, vector<32x128xbf16>
    %cst_41 = arith.constant dense<0.000000e+00> : vector<8x128xf32>
    %137 = tpu.matmul %135, %136, %cst_41 {dimension_numbers = #tpu.dot_dimension_numbers<[1], [0], [0], [1], [0, 0, 1, 1], [], []>} : vector<8x32xbf16>, vector<32x128xbf16>, vector<8x128xf32> -> vector<8x128xf32>
    %c0_42 = arith.constant 0 : index
    %c0_43 = arith.constant 0 : index
    %138 = vector.load %arg9[%c0_42, %c0_43] : memref<1x128xf32, #tpu.memory_space<vmem>>, vector<1x128xf32>
    %139 = vector.broadcast %138 : vector<1x128xf32> to vector<8x128xf32>
    %140 = arith.addf %137, %139 : vector<8x128xf32>
    %cst_44 = arith.constant 0.000000e+00 : f32
    %141 = vector.broadcast %cst_44 : f32 to vector<8x128xf32>
    %142 = arith.maximumf %140, %141 : vector<8x128xf32>
    %143 = arith.truncf %142 : vector<8x128xf32> to vector<8x128xbf16>
    %c0_45 = arith.constant 0 : index
    %c0_46 = arith.constant 0 : index
    %144 = vector.load %arg10[%c0_45, %c0_46] : memref<128x32xbf16, #tpu.memory_space<vmem>>, vector<128x32xbf16>
    %cst_47 = arith.constant dense<0.000000e+00> : vector<8x32xf32>
    %145 = tpu.matmul %143, %144, %cst_47 {dimension_numbers = #tpu.dot_dimension_numbers<[1], [0], [0], [1], [0, 0, 1, 1], [], []>} : vector<8x128xbf16>, vector<128x32xbf16>, vector<8x32xf32> -> vector<8x32xf32>
    %c0_48 = arith.constant 0 : index
    %c0_49 = arith.constant 0 : index
    %146 = vector.load %arg11[%c0_48, %c0_49] : memref<1x32xf32, #tpu.memory_space<vmem>>, vector<1x32xf32>
    %147 = vector.broadcast %146 : vector<1x32xf32> to vector<8x32xf32>
    %148 = arith.addf %145, %147 : vector<8x32xf32>
    %149 = arith.addf %134, %148 : vector<8x32xf32>
    %c0_50 = arith.constant 0 : index
    %c0_51 = arith.constant 0 : index
    %150 = vector.load %arg12[%c0_50, %c0_51] : memref<1x32xf32, #tpu.memory_space<vmem>>, vector<1x32xf32>
    %c0_52 = arith.constant 0 : index
    %c0_53 = arith.constant 0 : index
    %151 = vector.load %arg13[%c0_52, %c0_53] : memref<1x32xf32, #tpu.memory_space<vmem>>, vector<1x32xf32>
    %cst_54 = arith.constant dense<0.000000e+00> : vector<8xf32>
    %152 = vector.multi_reduction <add>, %149, %cst_54 [1] : vector<8x32xf32> to vector<8xf32>
    %153 = vector.shape_cast %152 : vector<8xf32> to vector<8x1xf32>
    %cst_55 = arith.constant 3.200000e+01 : f32
    %154 = vector.broadcast %cst_55 : f32 to vector<8x1xf32>
    %155 = arith.divf %153, %154 : vector<8x1xf32>
    %156 = vector.broadcast %155 : vector<8x1xf32> to vector<8x32xf32>
    %157 = arith.subf %149, %156 : vector<8x32xf32>
    %158 = arith.mulf %157, %157 : vector<8x32xf32>
    %cst_56 = arith.constant dense<0.000000e+00> : vector<8xf32>
    %159 = vector.multi_reduction <add>, %158, %cst_56 [1] : vector<8x32xf32> to vector<8xf32>
    %160 = vector.shape_cast %159 : vector<8xf32> to vector<8x1xf32>
    %cst_57 = arith.constant 3.200000e+01 : f32
    %161 = vector.broadcast %cst_57 : f32 to vector<8x1xf32>
    %162 = arith.divf %160, %161 : vector<8x1xf32>
    %163 = vector.broadcast %155 : vector<8x1xf32> to vector<8x32xf32>
    %164 = arith.subf %149, %163 : vector<8x32xf32>
    %cst_58 = arith.constant 9.99999974E-6 : f32
    %165 = vector.broadcast %cst_58 : f32 to vector<8x1xf32>
    %166 = arith.addf %162, %165 : vector<8x1xf32>
    %167 = math.rsqrt %166 : vector<8x1xf32>
    %168 = vector.broadcast %167 : vector<8x1xf32> to vector<8x32xf32>
    %169 = arith.mulf %164, %168 : vector<8x32xf32>
    %170 = vector.broadcast %150 : vector<1x32xf32> to vector<8x32xf32>
    %171 = arith.mulf %169, %170 : vector<8x32xf32>
    %172 = vector.broadcast %151 : vector<1x32xf32> to vector<8x32xf32>
    %173 = arith.addf %171, %172 : vector<8x32xf32>
    %c0_59 = arith.constant 0 : index
    %c0_60 = arith.constant 0 : index
    %174 = vector.load %arg14[%c0_59, %c0_60] : memref<8x32xf32, #tpu.memory_space<vmem>>, vector<8x32xf32>
    tpu.vector_store %arg14[%c0_59, %c0_60], %173 {strides = array<i32>} : memref<8x32xf32, #tpu.memory_space<vmem>>, vector<8x32xf32>,
    return
  }
  func.func @transform_0(%arg0: i32) -> (i32, i32) {
    %c0_i32 = arith.constant 0 : i32
    %c0_i32_0 = arith.constant 0 : i32
    return %arg0, %c0_i32 : i32, i32
  }
  func.func @transform_1(%arg0: i32) -> (i32, i32) {
    %c0_i32 = arith.constant 0 : i32
    %c0_i32_0 = arith.constant 0 : i32
    %c0_i32_1 = arith.constant 0 : i32
    return %c0_i32, %c0_i32_0 : i32, i32
  }
  func.func @transform_2(%arg0: i32) -> (i32, i32) {
    %c0_i32 = arith.constant 0 : i32
    %c0_i32_0 = arith.constant 0 : i32
    %c0_i32_1 = arith.constant 0 : i32
    return %c0_i32, %c0_i32_0 : i32, i32
  }
  func.func @transform_3(%arg0: i32) -> (i32, i32) {
    %c0_i32 = arith.constant 0 : i32
    %c0_i32_0 = arith.constant 0 : i32
    %c0_i32_1 = arith.constant 0 : i32
    return %c0_i32, %c0_i32_0 : i32, i32
  }
  func.func @transform_4(%arg0: i32) -> (i32, i32) {
    %c0_i32 = arith.constant 0 : i32
    %c0_i32_0 = arith.constant 0 : i32
    %c0_i32_1 = arith.constant 0 : i32
    return %c0_i32, %c0_i32_0 : i32, i32
  }
  func.func @transform_5(%arg0: i32) -> (i32, i32) {
    %c0_i32 = arith.constant 0 : i32
    %c0_i32_0 = arith.constant 0 : i32
    %c0_i32_1 = arith.constant 0 : i32
    return %c0_i32, %c0_i32_0 : i32, i32
  }
  func.func @transform_6(%arg0: i32) -> (i32, i32) {
    %c0_i32 = arith.constant 0 : i32
    %c0_i32_0 = arith.constant 0 : i32
    %c0_i32_1 = arith.constant 0 : i32
    return %c0_i32, %c0_i32_0 : i32, i32
  }
  func.func @transform_7(%arg0: i32) -> (i32, i32) {
    %c0_i32 = arith.constant 0 : i32
    %c0_i32_0 = arith.constant 0 : i32
    %c0_i32_1 = arith.constant 0 : i32
    return %c0_i32, %c0_i32_0 : i32, i32
  }
  func.func @transform_8(%arg0: i32) -> (i32, i32) {
    %c0_i32 = arith.constant 0 : i32
    %c0_i32_0 = arith.constant 0 : i32
    %c0_i32_1 = arith.constant 0 : i32
    return %c0_i32, %c0_i32_0 : i32, i32
  }
  func.func @transform_9(%arg0: i32) -> (i32, i32) {
    %c0_i32 = arith.constant 0 : i32
    %c0_i32_0 = arith.constant 0 : i32
    %c0_i32_1 = arith.constant 0 : i32
    return %c0_i32, %c0_i32_0 : i32, i32
  }
  func.func @transform_10(%arg0: i32) -> (i32, i32) {
    %c0_i32 = arith.constant 0 : i32
    %c0_i32_0 = arith.constant 0 : i32
    %c0_i32_1 = arith.constant 0 : i32
    return %c0_i32, %c0_i32_0 : i32, i32
  }
  func.func @transform_11(%arg0: i32) -> (i32, i32) {
    %c0_i32 = arith.constant 0 : i32
    %c0_i32_0 = arith.constant 0 : i32
    %c0_i32_1 = arith.constant 0 : i32
    return %c0_i32, %c0_i32_0 : i32, i32
  }
  func.func @transform_12(%arg0: i32) -> (i32, i32) {
    %c0_i32 = arith.constant 0 : i32
    %c0_i32_0 = arith.constant 0 : i32
    %c0_i32_1 = arith.constant 0 : i32
    return %c0_i32, %c0_i32_0 : i32, i32
  }
  func.func @transform_13(%arg0: i32) -> (i32, i32) {
    %c0_i32 = arith.constant 0 : i32
    %c0_i32_0 = arith.constant 0 : i32
    return %arg0, %c0_i32 : i32, i32
  }
}

</mosaic_0001>

<llo_original>
// kernel: tpu_custom_call.1
$region0: #{tpu_custom_call.1}
  #allocation0 [shape = 'u32[]', space=smem, size = 0x4, offset = 0x4, fixed_abs, tag = 'smem constant byte address 0x4 - core index']
  #allocation1 [shape = 'u32[144,128]{1,0:T(1,128)}', space=vmem, size = 0x12000, scoped, tag = 'internal scratch']
  %s0 = inlined_call_operand.vmem [shape: f32[16,32], index: 0, kind: input, shape index: {}]
  %s1 = inlined_call_operand.vmem [shape: bf16[32,96], index: 1, kind: input, shape index: {}]
  %s2 = inlined_call_operand.vmem [shape: f32[1,96], index: 2, kind: input, shape index: {}]
  %s3 = inlined_call_operand.vmem [shape: bf16[32,32], index: 3, kind: input, shape index: {}]
  %s4 = inlined_call_operand.vmem [shape: f32[1,32], index: 4, kind: input, shape index: {}]
  %s5 = inlined_call_operand.vmem [shape: f32[1,32], index: 5, kind: input, shape index: {}]
  %s6 = inlined_call_operand.vmem [shape: f32[1,32], index: 6, kind: input, shape index: {}]
  %s7 = inlined_call_operand.vmem [shape: bf16[32,128], index: 7, kind: input, shape index: {}]
  %s8 = inlined_call_operand.vmem [shape: f32[1,128], index: 8, kind: input, shape index: {}]
  %s9 = inlined_call_operand.vmem [shape: bf16[128,32], index: 9, kind: input, shape index: {}]
  %s10 = inlined_call_operand.vmem [shape: f32[1,32], index: 10, kind: input, shape index: {}]
  %s11 = inlined_call_operand.vmem [shape: f32[1,32], index: 11, kind: input, shape index: {}]
  %s12 = inlined_call_operand.vmem [shape: f32[1,32], index: 12, kind: input, shape index: {}]
  %s13 = inlined_call_operand.hbm [shape: f32[16,32], index: 13, kind: output, shape index: {}]
  %s14 = sld [smem:[#allocation0]]
  $region85: #{tpu_custom_call.1} parent=0
    _
  %s16 = ssub.s32 1, %s14
  %s17 = scalar_select 0, %s16, %s14
  $region1: #{tpu_custom_call.1} parent=0
    #allocation2 [shape = 'u8[8192]{0}', space=vmem, size = 0x2000, scoped, tag = 'output window, operand 0']
    #allocation3 [shape = 's32[2]{0}', space=sflag, size = 0x8, scoped, tag = 'scoped memory for tpu_custom_call.1']
    %18 = vsyncpa [#allocation3], 0
    %s19 = scalar_lea.sflag [#allocation3], 1
    %20 = vsyncpa %s19, 0
    loop: start=0, step=1, limit=4
    $region2: #{tpu_custom_call.1} parent=1 // loop_pre_header
      _
    $region3: #{tpu_custom_call.1} parent=1 // loop_header
      %s22 = sphi 0, %s26
      %p23 = scmp.ge.s32.totalorder %s22, 4
      %s32 = sphi 0, %s34
      %s35 = sphi 0, %s32
      %s36 = sphi 0, %s35
      %s52 = sphi 0, %s36
      %s56 = sphi 0, %s56
      %s58 = sphi 0, %s56
      %s59 = sphi 0, %s58
      %s73 = sphi 0, %s59
      %s77 = sphi 0, %s77
      %s79 = sphi 0, %s77
      %s80 = sphi 0, %s79
      %s94 = sphi 0, %s80
      %s98 = sphi 0, %s98
      %s100 = sphi 0, %s98
      %s101 = sphi 0, %s100
      %s115 = sphi 0, %s101
      %s119 = sphi 0, %s119
      %s121 = sphi 0, %s119
      %s122 = sphi 0, %s121
      %s136 = sphi 0, %s122
      %s140 = sphi 0, %s140
      %s142 = sphi 0, %s140
      %s143 = sphi 0, %s142
      %s157 = sphi 0, %s143
      %s161 = sphi 0, %s161
      %s163 = sphi 0, %s161
      %s164 = sphi 0, %s163
      %s178 = sphi 0, %s164
      %s182 = sphi 0, %s182
      %s184 = sphi 0, %s182
      %s185 = sphi 0, %s184
      %s199 = sphi 0, %s185
      %s203 = sphi 0, %s203
      %s205 = sphi 0, %s203
      %s206 = sphi 0, %s205
      %s220 = sphi 0, %s206
      %s224 = sphi 0, %s224
      %s226 = sphi 0, %s224
      %s227 = sphi 0, %s226
      %s241 = sphi 0, %s227
      %s245 = sphi 0, %s245
      %s247 = sphi 0, %s245
      %s248 = sphi 0, %s247
      %s262 = sphi 0, %s248
      %s266 = sphi 0, %s266
      %s268 = sphi 0, %s266
      %s269 = sphi 0, %s268
      %s283 = sphi 0, %s269
      %s287 = sphi 0, %s287
      %s289 = sphi 0, %s287
      %s290 = sphi 0, %s289
      %s304 = sphi 0, %s290
      %s310 = sphi 0, %s312
      %s313 = sphi 0, %s310
      %s314 = sphi 0, %s313
      %s330 = sphi 0, %s314
    $region4: #{tpu_custom_call.1} parent=1 // loop_header_branch
      %25 = sbr.rel (%p23) target = $region8
    $region5: #{tpu_custom_call.1} parent=1 // loop_body
      %s27 = ssub.s32 %s22, 1
      %s28 = ssub.s32 %s22, 2
      %s29 = sadd.s32 %s22, 1
      %s30 = ssub.s32 %s22, %s29
      %p31 = scmp.eq.s32.totalorder %s30, 0
      %s33 = sadd.s32 %s32, 1
      %s34 = scalar_select %p31, %s32, %s33
      %p37 = pneg %p31
      %p38 = scmp.eq.s32.totalorder %s22, 1
      %p39 = por %p37, %p38
      %p40 = scmp.ne.s32.totalorder %s32, %s35
      %p41 = scmp.eq.s32.totalorder %s22, 0
      %p42 = por %p40, %p41
      %p43 = scmp.ne.s32.totalorder %s32, %s35
      %p44 = scmp.eq.s32.totalorder %s27, 1
      %p45 = por %p43, %p44
      %p46 = scmp.ne.s32.totalorder %s35, %s36
      %p47 = scmp.eq.s32.totalorder %s27, 0
      %p48 = por %p46, %p47
      %p49 = scmp.ne.s32.totalorder %s35, %s36
      %p50 = scmp.eq.s32.totalorder %s28, 1
      %p51 = por %p49, %p50
      %p53 = scmp.ne.s32.totalorder %s36, %s52
      %p54 = scmp.eq.s32.totalorder %s28, 0
      %p55 = por %p53, %p54
      %s57 = sadd.s32 %s56, 1
      %p60 = scmp.eq.s32.totalorder %s22, 1
      %p61 = scmp.ne.s32.totalorder %s56, %s58
      %p62 = scmp.eq.s32.totalorder %s22, 0
      %p63 = por %p61, %p62
      %p64 = scmp.ne.s32.totalorder %s56, %s58
      %p65 = scmp.eq.s32.totalorder %s27, 1
      %p66 = por %p64, %p65
      %p67 = scmp.ne.s32.totalorder %s58, %s59
      %p68 = scmp.eq.s32.totalorder %s27, 0
      %p69 = por %p67, %p68
      %p70 = scmp.ne.s32.totalorder %s58, %s59
      %p71 = scmp.eq.s32.totalorder %s28, 1
      %p72 = por %p70, %p71
      %p74 = scmp.ne.s32.totalorder %s59, %s73
      %p75 = scmp.eq.s32.totalorder %s28, 0
      %p76 = por %p74, %p75
      %s78 = sadd.s32 %s77, 1
      %p81 = scmp.eq.s32.totalorder %s22, 1
      %p82 = scmp.ne.s32.totalorder %s77, %s79
      %p83 = scmp.eq.s32.totalorder %s22, 0
      %p84 = por %p82, %p83
      %p85 = scmp.ne.s32.totalorder %s77, %s79
      %p86 = scmp.eq.s32.totalorder %s27, 1
      %p87 = por %p85, %p86
      %p88 = scmp.ne.s32.totalorder %s79, %s80
      %p89 = scmp.eq.s32.totalorder %s27, 0
      %p90 = por %p88, %p89
      %p91 = scmp.ne.s32.totalorder %s79, %s80
      %p92 = scmp.eq.s32.totalorder %s28, 1
      %p93 = por %p91, %p92
      %p95 = scmp.ne.s32.totalorder %s80, %s94
      %p96 = scmp.eq.s32.totalorder %s28, 0
      %p97 = por %p95, %p96
      %s99 = sadd.s32 %s98, 1
      %p102 = scmp.eq.s32.totalorder %s22, 1
      %p103 = scmp.ne.s32.totalorder %s98, %s100
      %p104 = scmp.eq.s32.totalorder %s22, 0
      %p105 = por %p103, %p104
      %p106 = scmp.ne.s32.totalorder %s98, %s100
      %p107 = scmp.eq.s32.totalorder %s27, 1
      %p108 = por %p106, %p107
      %p109 = scmp.ne.s32.totalorder %s100, %s101
      %p110 = scmp.eq.s32.totalorder %s27, 0
      %p111 = por %p109, %p110
      %p112 = scmp.ne.s32.totalorder %s100, %s101
      %p113 = scmp.eq.s32.totalorder %s28, 1
      %p114 = por %p112, %p113
      %p116 = scmp.ne.s32.totalorder %s101, %s115
      %p117 = scmp.eq.s32.totalorder %s28, 0
      %p118 = por %p116, %p117
      %s120 = sadd.s32 %s119, 1
      %p123 = scmp.eq.s32.totalorder %s22, 1
      %p124 = scmp.ne.s32.totalorder %s119, %s121
      %p125 = scmp.eq.s32.totalorder %s22, 0
      %p126 = por %p124, %p125
      %p127 = scmp.ne.s32.totalorder %s119, %s121
      %p128 = scmp.eq.s32.totalorder %s27, 1
      %p129 = por %p127, %p128
      %p130 = scmp.ne.s32.totalorder %s121, %s122
      %p131 = scmp.eq.s32.totalorder %s27, 0
      %p132 = por %p130, %p131
      %p133 = scmp.ne.s32.totalorder %s121, %s122
      %p134 = scmp.eq.s32.totalorder %s28, 1
      %p135 = por %p133, %p134
      %p137 = scmp.ne.s32.totalorder %s122, %s136
      %p138 = scmp.eq.s32.totalorder %s28, 0
      %p139 = por %p137, %p138
      %s141 = sadd.s32 %s140, 1
      %p144 = scmp.eq.s32.totalorder %s22, 1
      %p145 = scmp.ne.s32.totalorder %s140, %s142
      %p146 = scmp.eq.s32.totalorder %s22, 0
      %p147 = por %p145, %p146
      %p148 = scmp.ne.s32.totalorder %s140, %s142
      %p149 = scmp.eq.s32.totalorder %s27, 1
      %p150 = por %p148, %p149
      %p151 = scmp.ne.s32.totalorder %s142, %s143
      %p152 = scmp.eq.s32.totalorder %s27, 0
      %p153 = por %p151, %p152
      %p154 = scmp.ne.s32.totalorder %s142, %s143
      %p155 = scmp.eq.s32.totalorder %s28, 1
      %p156 = por %p154, %p155
      %p158 = scmp.ne.s32.totalorder %s143, %s157
      %p159 = scmp.eq.s32.totalorder %s28, 0
      %p160 = por %p158, %p159
      %s162 = sadd.s32 %s161, 1
      %p165 = scmp.eq.s32.totalorder %s22, 1
      %p166 = scmp.ne.s32.totalorder %s161, %s163
      %p167 = scmp.eq.s32.totalorder %s22, 0
      %p168 = por %p166, %p167
      %p169 = scmp.ne.s32.totalorder %s161, %s163
      %p170 = scmp.eq.s32.totalorder %s27, 1
      %p171 = por %p169, %p170
      %p172 = scmp.ne.s32.totalorder %s163, %s164
      %p173 = scmp.eq.s32.totalorder %s27, 0
      %p174 = por %p172, %p173
      %p175 = scmp.ne.s32.totalorder %s163, %s164
      %p176 = scmp.eq.s32.totalorder %s28, 1
      %p177 = por %p175, %p176
      %p179 = scmp.ne.s32.totalorder %s164, %s178
      %p180 = scmp.eq.s32.totalorder %s28, 0
      %p181 = por %p179, %p180
      %s183 = sadd.s32 %s182, 1
      %p186 = scmp.eq.s32.totalorder %s22, 1
      %p187 = scmp.ne.s32.totalorder %s182, %s184
      %p188 = scmp.eq.s32.totalorder %s22, 0
      %p189 = por %p187, %p188
      %p190 = scmp.ne.s32.totalorder %s182, %s184
      %p191 = scmp.eq.s32.totalorder %s27, 1
      %p192 = por %p190, %p191
      %p193 = scmp.ne.s32.totalorder %s184, %s185
      %p194 = scmp.eq.s32.totalorder %s27, 0
      %p195 = por %p193, %p194
      %p196 = scmp.ne.s32.totalorder %s184, %s185
      %p197 = scmp.eq.s32.totalorder %s28, 1
      %p198 = por %p196, %p197
      %p200 = scmp.ne.s32.totalorder %s185, %s199
      %p201 = scmp.eq.s32.totalorder %s28, 0
      %p202 = por %p200, %p201
      %s204 = sadd.s32 %s203, 1
      %p207 = scmp.eq.s32.totalorder %s22, 1
      %p208 = scmp.ne.s32.totalorder %s203, %s205
      %p209 = scmp.eq.s32.totalorder %s22, 0
      %p210 = por %p208, %p209
      %p211 = scmp.ne.s32.totalorder %s203, %s205
      %p212 = scmp.eq.s32.totalorder %s27, 1
      %p213 = por %p211, %p212
      %p214 = scmp.ne.s32.totalorder %s205, %s206
      %p215 = scmp.eq.s32.totalorder %s27, 0
      %p216 = por %p214, %p215
      %p217 = scmp.ne.s32.totalorder %s205, %s206
      %p218 = scmp.eq.s32.totalorder %s28, 1
      %p219 = por %p217, %p218
      %p221 = scmp.ne.s32.totalorder %s206, %s220
      %p222 = scmp.eq.s32.totalorder %s28, 0
      %p223 = por %p221, %p222
      %s225 = sadd.s32 %s224, 1
      %p228 = scmp.eq.s32.totalorder %s22, 1
      %p229 = scmp.ne.s32.totalorder %s224, %s226
      %p230 = scmp.eq.s32.totalorder %s22, 0
      %p231 = por %p229, %p230
      %p232 = scmp.ne.s32.totalorder %s224, %s226
      %p233 = scmp.eq.s32.totalorder %s27, 1
      %p234 = por %p232, %p233
      %p235 = scmp.ne.s32.totalorder %s226, %s227
      %p236 = scmp.eq.s32.totalorder %s27, 0
      %p237 = por %p235, %p236
      %p238 = scmp.ne.s32.totalorder %s226, %s227
      %p239 = scmp.eq.s32.totalorder %s28, 1
      %p240 = por %p238, %p239
      %p242 = scmp.ne.s32.totalorder %s227, %s241
      %p243 = scmp.eq.s32.totalorder %s28, 0
      %p244 = por %p242, %p243
      %s246 = sadd.s32 %s245, 1
      %p249 = scmp.eq.s32.totalorder %s22, 1
      %p250 = scmp.ne.s32.totalorder %s245, %s247
      %p251 = scmp.eq.s32.totalorder %s22, 0
      %p252 = por %p250, %p251
      %p253 = scmp.ne.s32.totalorder %s245, %s247
      %p254 = scmp.eq.s32.totalorder %s27, 1
      %p255 = por %p253, %p254
      %p256 = scmp.ne.s32.totalorder %s247, %s248
      %p257 = scmp.eq.s32.totalorder %s27, 0
      %p258 = por %p256, %p257
      %p259 = scmp.ne.s32.totalorder %s247, %s248
      %p260 = scmp.eq.s32.totalorder %s28, 1
      %p261 = por %p259, %p260
      %p263 = scmp.ne.s32.totalorder %s248, %s262
      %p264 = scmp.eq.s32.totalorder %s28, 0
      %p265 = por %p263, %p264
      %s267 = sadd.s32 %s266, 1
      %p270 = scmp.eq.s32.totalorder %s22, 1
      %p271 = scmp.ne.s32.totalorder %s266, %s268
      %p272 = scmp.eq.s32.totalorder %s22, 0
      %p273 = por %p271, %p272
      %p274 = scmp.ne.s32.totalorder %s266, %s268
      %p275 = scmp.eq.s32.totalorder %s27, 1
      %p276 = por %p274, %p275
      %p277 = scmp.ne.s32.totalorder %s268, %s269
      %p278 = scmp.eq.s32.totalorder %s27, 0
      %p279 = por %p277, %p278
      %p280 = scmp.ne.s32.totalorder %s268, %s269
      %p281 = scmp.eq.s32.totalorder %s28, 1
      %p282 = por %p280, %p281
      %p284 = scmp.ne.s32.totalorder %s269, %s283
      %p285 = scmp.eq.s32.totalorder %s28, 0
      %p286 = por %p284, %p285
      %s288 = sadd.s32 %s287, 1
      %p291 = scmp.eq.s32.totalorder %s22, 1
      %p292 = scmp.ne.s32.totalorder %s287, %s289
      %p293 = scmp.eq.s32.totalorder %s22, 0
      %p294 = por %p292, %p293
      %p295 = scmp.ne.s32.totalorder %s287, %s289
      %p296 = scmp.eq.s32.totalorder %s27, 1
      %p297 = por %p295, %p296
      %p298 = scmp.ne.s32.totalorder %s289, %s290
      %p299 = scmp.eq.s32.totalorder %s27, 0
      %p300 = por %p298, %p299
      %p301 = scmp.ne.s32.totalorder %s289, %s290
      %p302 = scmp.eq.s32.totalorder %s28, 1
      %p303 = por %p301, %p302
      %p305 = scmp.ne.s32.totalorder %s290, %s304
      %p306 = scmp.eq.s32.totalorder %s28, 0
      %p307 = por %p305, %p306
      %s308 = ssub.s32 %s22, %s29
      %p309 = scmp.eq.s32.totalorder %s308, 0
      %s311 = sadd.s32 %s310, 1
      %s312 = scalar_select %p309, %s310, %s311
      %p315 = pneg %p309
      %p316 = scmp.eq.s32.totalorder %s22, 1
      %p317 = por %p315, %p316
      %p318 = scmp.ne.s32.totalorder %s310, %s313
      %p319 = scmp.eq.s32.totalorder %s22, 0
      %p320 = por %p318, %p319
      %p321 = scmp.ne.s32.totalorder %s310, %s313
      %p322 = scmp.eq.s32.totalorder %s27, 1
      %p323 = por %p321, %p322
      %p324 = scmp.ne.s32.totalorder %s313, %s314
      %p325 = scmp.eq.s32.totalorder %s27, 0
      %p326 = por %p324, %p325
      %p327 = scmp.ne.s32.totalorder %s313, %s314
      %p328 = scmp.eq.s32.totalorder %s28, 1
      %p329 = por %p327, %p328
      %p331 = scmp.ne.s32.totalorder %s314, %s330
      %p332 = scmp.eq.s32.totalorder %s28, 0
      %p333 = por %p331, %p332
      %p334 = scmp.le.s32.totalorder 1, %s22
      %p335 = scmp.lt.s32.totalorder %s22, 3
      %p336 = pnand %p334, %p335
      %p337 = pneg %p336
      // Predicated region
      $region9: #{tpu_custom_call.1} parent=5 // pred_check
        _
      $region10: #{tpu_custom_call.1} parent=5 // pred_check_branch
        %339 = sbr.rel (%p336) target = $region12
      $region11: #{tpu_custom_call.1} parent=5 // pred_region
        %s340 = ssub.s32 %s22, 1
        // Predicated region
        $region13: #{tpu_custom_call.1} parent=11 // pred_check
          %p341 = pneg %p69
        $region14: #{tpu_custom_call.1} parent=11 // pred_check_branch
          %343 = sbr.rel (%p341) target = $region16
        $region15: #{tpu_custom_call.1} parent=11 // pred_region
          _
        $region16: #{tpu_custom_call.1} parent=11 // pred_fallthru
          _
        // Predicated region
        $region17: #{tpu_custom_call.1} parent=11 // pred_check
          %p344 = pneg %p90
        $region18: #{tpu_custom_call.1} parent=11 // pred_check_branch
          %346 = sbr.rel (%p344) target = $region20
        $region19: #{tpu_custom_call.1} parent=11 // pred_region
          _
        $region20: #{tpu_custom_call.1} parent=11 // pred_fallthru
          _
        // Predicated region
        $region21: #{tpu_custom_call.1} parent=11 // pred_check
          %p347 = pneg %p111
        $region22: #{tpu_custom_call.1} parent=11 // pred_check_branch
          %349 = sbr.rel (%p347) target = $region24
        $region23: #{tpu_custom_call.1} parent=11 // pred_region
          _
        $region24: #{tpu_custom_call.1} parent=11 // pred_fallthru
          _
        // Predicated region
        $region25: #{tpu_custom_call.1} parent=11 // pred_check
          %p350 = pneg %p132
        $region26: #{tpu_custom_call.1} parent=11 // pred_check_branch
          %352 = sbr.rel (%p350) target = $region28
        $region27: #{tpu_custom_call.1} parent=11 // pred_region
          _
        $region28: #{tpu_custom_call.1} parent=11 // pred_fallthru
          _
        // Predicated region
        $region29: #{tpu_custom_call.1} parent=11 // pred_check
          %p353 = pneg %p153
        $region30: #{tpu_custom_call.1} parent=11 // pred_check_branch
          %355 = sbr.rel (%p353) target = $region32
        $region31: #{tpu_custom_call.1} parent=11 // pred_region
          _
        $region32: #{tpu_custom_call.1} parent=11 // pred_fallthru
          _
        // Predicated region
        $region33: #{tpu_custom_call.1} parent=11 // pred_check
          %p356 = pneg %p174
        $region34: #{tpu_custom_call.1} parent=11 // pred_check_branch
          %358 = sbr.rel (%p356) target = $region36
        $region35: #{tpu_custom_call.1} parent=11 // pred_region
          _
        $region36: #{tpu_custom_call.1} parent=11 // pred_fallthru
          _
        // Predicated region
        $region37: #{tpu_custom_call.1} parent=11 // pred_check
          %p359 = pneg %p195
        $region38: #{tpu_custom_call.1} parent=11 // pred_check_branch
          %361 = sbr.rel (%p359) target = $region40
        $region39: #{tpu_custom_call.1} parent=11 // pred_region
          _
        $region40: #{tpu_custom_call.1} parent=11 // pred_fallthru
          _
        // Predicated region
        $region41: #{tpu_custom_call.1} parent=11 // pred_check
          %p362 = pneg %p216
        $region42: #{tpu_custom_call.1} parent=11 // pred_check_branch
          %364 = sbr.rel (%p362) target = $region44
        $region43: #{tpu_custom_call.1} parent=11 // pred_region
          _
        $region44: #{tpu_custom_call.1} parent=11 // pred_fallthru
          _
        // Predicated region
        $region45: #{tpu_custom_call.1} parent=11 // pred_check
          %p365 = pneg %p237
        $region46: #{tpu_custom_call.1} parent=11 // pred_check_branch
          %367 = sbr.rel (%p365) target = $region48
        $region47: #{tpu_custom_call.1} parent=11 // pred_region
          _
        $region48: #{tpu_custom_call.1} parent=11 // pred_fallthru
          _
        // Predicated region
        $region49: #{tpu_custom_call.1} parent=11 // pred_check
          %p368 = pneg %p258
        $region50: #{tpu_custom_call.1} parent=11 // pred_check_branch
          %370 = sbr.rel (%p368) target = $region52
        $region51: #{tpu_custom_call.1} parent=11 // pred_region
          _
        $region52: #{tpu_custom_call.1} parent=11 // pred_fallthru
          _
        // Predicated region
        $region53: #{tpu_custom_call.1} parent=11 // pred_check
          %p371 = pneg %p279
        $region54: #{tpu_custom_call.1} parent=11 // pred_check_branch
          %373 = sbr.rel (%p371) target = $region56
        $region55: #{tpu_custom_call.1} parent=11 // pred_region
          _
        $region56: #{tpu_custom_call.1} parent=11 // pred_fallthru
          _
        // Predicated region
        $region57: #{tpu_custom_call.1} parent=11 // pred_check
          %p374 = pneg %p300
        $region58: #{tpu_custom_call.1} parent=11 // pred_check_branch
          %376 = sbr.rel (%p374) target = $region60
        $region59: #{tpu_custom_call.1} parent=11 // pred_region
          _
        $region60: #{tpu_custom_call.1} parent=11 // pred_fallthru
          _
      $region12: #{tpu_custom_call.1} parent=5 // pred_fallthru
        _
      %p377 = scmp.lt.s32.totalorder %s22, 2
      // Predicated region
      $region61: #{tpu_custom_call.1} parent=5 // pred_check
        %p378 = pneg %p377
      $region62: #{tpu_custom_call.1} parent=5 // pred_check_branch
        %380 = sbr.rel (%p378) target = $region64
      $region63: #{tpu_custom_call.1} parent=5 // pred_region
        // Predicated region
        $region65: #{tpu_custom_call.1} parent=63 // pred_check
          %p381 = pneg %p42
        $region66: #{tpu_custom_call.1} parent=63 // pred_check_branch
          %383 = sbr.rel (%p381) target = $region68
        $region67: #{tpu_custom_call.1} parent=63 // pred_region
          %p384 = scmp.lt.s32.totalorder %s22, 1
          %s385 = scalar_select %p384, %s22, 1
          %s386 = smul.addr %s385, 8
          %s387 = scalar_lea.vmem %s0, %s386
        $region68: #{tpu_custom_call.1} parent=63 // pred_fallthru
          _
      $region64: #{tpu_custom_call.1} parent=5 // pred_fallthru
        _
      %p388 = scmp.le.s32.totalorder 1, %s22
      %p389 = scmp.lt.s32.totalorder %s22, 3
      %p390 = pnand %p388, %p389
      %p391 = pneg %p390
      // Predicated region
      $region69: #{tpu_custom_call.1} parent=5 // pred_check
        _
      $region70: #{tpu_custom_call.1} parent=5 // pred_check_branch
        %393 = sbr.rel (%p390) target = $region72
      $region71: #{tpu_custom_call.1} parent=5 // pred_region
        %s394 = ssub.s32 %s22, 1
        %p395 = scmp.lt.s32.totalorder %s27, 1
        %s396 = scalar_select %p395, %s27, 1
        %s397 = smul.addr %s396, 8
        %s398 = scalar_lea.vmem %s0, %s397
        %p399 = pneg %p48
        %p400 = pneg %p45
        %p401 = pneg %p69
        %p402 = pneg %p66
        %p403 = pneg %p90
        %p404 = pneg %p87
        %p405 = pneg %p111
        %p406 = pneg %p108
        %p407 = pneg %p132
        %p408 = pneg %p129
        %p409 = pneg %p153
        %p410 = pneg %p150
        %p411 = pneg %p174
        %p412 = pneg %p171
        %p413 = pneg %p195
        %p414 = pneg %p192
        %p415 = pneg %p216
        %p416 = pneg %p213
        %p417 = pneg %p237
        %p418 = pneg %p234
        %p419 = pneg %p258
        %p420 = pneg %p255
        %p421 = pneg %p279
        %p422 = pneg %p276
        %p423 = pneg %p300
        %p424 = pneg %p297
        %p425 = pneg %p326
        %p426 = pneg %p323
        %s427 = sand.u32 %s313, 1
        %s428 = scalar_lea.sflag [#allocation3], %s427
        %s429 = sand.u32 %s313, 1
        %s430 = smul.addr %s429, 8
        %s431 = scalar_lea.vmem [#allocation2], %s430
        %p432 = scmp.lt.s32.totalorder %s27, 1
        %s433 = scalar_select %p432, %s27, 1
        %s434 = smul.addr %s433, 8
        %s435 = scalar_lea.vmem %s0, %s434
        %v437 = vld [vmem:[%s435] sm:$0xff]
        %v438 = vpack.c.bf16 %v437, %v437
        %v439 = vld [vmem:[%s1] sm:$0xf]
        %v440 = vld [vmem:[%s1 + $0x4] sm:$0xf]
        %v441 = vld [vmem:[%s1 + $0x8] sm:$0xf]
        %v442 = vld [vmem:[%s1 + $0xc] sm:$0xf]
        %v443 = vld [vmem:[%s2] sm:$0x1]
        %v445 = vlaneseq
        %v446 = vshrl.u32 %v445, 7
        %v447 = vsub.s32 0, %v446
        %v448 = vrot.slane %v443, %v447
        %v454 = vunpack.c.l.b16 %v439
        %v455 = vunpack.c.l.b16 %v440
        %v456 = vunpack.c.l.b16 %v441
        %v457 = vunpack.c.l.b16 %v442
        %v458 = vpack.c.b16 %v455, %v454
        %v459 = vpack.c.b16 %v457, %v456
        %vm462 = vcmask 261120
        %v464 = vsel %vm462, %v438, 0
        %466 = vmatprep.subr.bf16.mxu0 0
        %467 = vmatpush1.bf16.msra.mxu0 0
        %468 = vmatprep.subr.bf16.mxu0 0
        %469 = vmatpush1.bf16.msra.mxu0 0
        %470 = vmatprep.subr.bf16.mxu0 0
        %471 = vmatpush1.bf16.msra.mxu0 0
        %472 = vmatprep.subr.bf16.mxu0 0
        %473 = vmatpush1.bf16.msra.mxu0 0
        %474 = vmatprep.subr.bf16.mxu0 0
        %475 = vmatpush1.bf16.msra.mxu0 0
        %476 = vmatprep.subr.bf16.mxu0 0
        %477 = vmatpush1.bf16.msra.mxu0 0
        %478 = vmatprep.subr.bf16.mxu0 0
        %479 = vmatpush1.bf16.msra.mxu0 %v459
        %480 = vmatprep.subr.bf16.mxu0 0
        %481 = vmatpush1.bf16.msra.mxu0 %v458
        %482 = vmatprep.subr.bf16.mxu0 0
        %483 = vmatpush2.bf16.msra.mxu0 0
        %484 = vmatprep.subr.bf16.mxu0 0
        %485 = vmatpush2.bf16.msra.mxu0 0
        %486 = vmatprep.subr.bf16.mxu0 0
        %487 = vmatpush2.bf16.msra.mxu0 0
        %488 = vmatprep.subr.bf16.mxu0 0
        %489 = vmatpush2.bf16.msra.mxu0 0
        %490 = vmatprep.subr.bf16.mxu0 0
        %491 = vmatpush2.bf16.msra.mxu0 0
        %492 = vmatprep.subr.bf16.mxu0 0
        %493 = vmatpush2.bf16.msra.mxu0 0
        %494 = vmatprep.subr.bf16.mxu0 0
        %495 = vmatpush2.bf16.msra.mxu0 0
        %496 = vmatprep.subr.bf16.mxu0 0
        %497 = vmatpush2.bf16.msra.mxu0 0
        %498 = vmatprep.mubr.bf16.mxu0 0
        %499 = vmatmul.mubr.bf16.gmra.mxu0 %v464
        %v500 = vpop.f32.mrf.mxu0
        %v501 = vadd.f32 %v448, %v500
        %v502 = vpop.f32.mrf.mxu0
        %v503 = vpop.f32.mrf.mxu0
        %v504 = vpop.f32.mrf.mxu0
        %505 = vdwg.mxu0
        %507 = vrot.lane.b32.xlu0 %v501, 96
        %v508 = vpop.permute.xlu0 %507
        %510 = vxpose.xlu0.b32.start [1/16] %v508, 128
        %511 = vxpose.xlu0.b32.cont [2/16] 0.0, 128
        %512 = vxpose.xlu0.b32.cont [3/16] 0.0, 128
        %513 = vxpose.xlu0.b32.cont [4/16] 0.0, 128
        %514 = vxpose.xlu0.b32.cont [5/16] 0.0, 128
        %515 = vxpose.xlu0.b32.cont [6/16] 0.0, 128
        %516 = vxpose.xlu0.b32.cont [7/16] 0.0, 128
        %517 = vxpose.xlu0.b32.cont [8/16] 0.0, 128
        %518 = vxpose.xlu0.b32.cont [9/16] 0.0, 128
        %519 = vxpose.xlu0.b32.cont [10/16] 0.0, 128
        %520 = vxpose.xlu0.b32.cont [11/16] 0.0, 128
        %521 = vxpose.xlu0.b32.cont [12/16] 0.0, 128
        %522 = vxpose.xlu0.b32.cont [13/16] 0.0, 128
        %523 = vxpose.xlu0.b32.cont [14/16] 0.0, 128
        %524 = vxpose.xlu0.b32.cont [15/16] 0.0, 128
        %525 = vxpose.xlu0.b32.end [16/16] 0.0, 128
        %v526 = vpop.trf.xlu0
        %v527 = vpop.trf.xlu0
        %v528 = vpop.trf.xlu0
        %v529 = vpop.trf.xlu0
        %v530 = vpop.trf.xlu0
        %v531 = vpop.trf.xlu0
        %v532 = vpop.trf.xlu0
        %v533 = vpop.trf.xlu0
        %v534 = vpop.trf.xlu0
        %v535 = vpop.trf.xlu0
        %v536 = vpop.trf.xlu0
        %v537 = vpop.trf.xlu0
        %v538 = vpop.trf.xlu0
        %v539 = vpop.trf.xlu0
        %v540 = vpop.trf.xlu0
        %v541 = vpop.trf.xlu0
        %v542 = vpack.c.bf16 %v501, %v501
        %v543 = vpack.c.bf16 %v526, %v526
        %vm544 = vcmask 64512
        %v546 = vsel %vm544, %v542, 0
        %vm548 = vcmask 1043456
        %v550 = vsel %vm548, %v543, 0
        %552 = vmatprep.subr.bf16.mxu0 0
        %553 = vmatpush1.bf16.msra.mxu0 0
        %554 = vmatprep.subr.bf16.mxu0 0
        %555 = vmatpush1.bf16.msra.mxu0 0
        %556 = vmatprep.subr.bf16.mxu0 0
        %557 = vmatpush1.bf16.msra.mxu0 0
        %558 = vmatprep.subr.bf16.mxu0 0
        %559 = vmatpush1.bf16.msra.mxu0 0
        %560 = vmatprep.subr.bf16.mxu0 0
        %561 = vmatpush1.bf16.msra.mxu0 0
        %562 = vmatprep.subr.bf16.mxu0 0
        %563 = vmatpush1.bf16.msra.mxu0 0
        %564 = vmatprep.subr.bf16.mxu0 0
        %565 = vmatpush1.bf16.msra.mxu0 0
        %566 = vmatprep.subr.bf16.mxu0 0
        %567 = vmatpush1.bf16.msra.mxu0 %v550
        %568 = vmatprep.subr.bf16.mxu0 0
        %569 = vmatpush2.bf16.msra.mxu0 0
        %570 = vmatprep.subr.bf16.mxu0 0
        %571 = vmatpush2.bf16.msra.mxu0 0
        %572 = vmatprep.subr.bf16.mxu0 0
        %573 = vmatpush2.bf16.msra.mxu0 0
        %574 = vmatprep.subr.bf16.mxu0 0
        %575 = vmatpush2.bf16.msra.mxu0 0
        %576 = vmatprep.subr.bf16.mxu0 0
        %577 = vmatpush2.bf16.msra.mxu0 0
        %578 = vmatprep.subr.bf16.mxu0 0
        %579 = vmatpush2.bf16.msra.mxu0 0
        %580 = vmatprep.subr.bf16.mxu0 0
        %581 = vmatpush2.bf16.msra.mxu0 0
        %582 = vmatprep.subr.bf16.mxu0 0
        %583 = vmatpush2.bf16.msra.mxu0 0
        %584 = vmatprep.mubr.bf16.mxu0 0
        %585 = vmatmul.mubr.bf16.gmra.mxu0 %v546
        %v586 = vpop.f32.mrf.mxu0
        %v587 = vadd.f32 0.0, %v586
        %v588 = vpop.f32.mrf.mxu0
        %v589 = vpop.f32.mrf.mxu0
        %v590 = vpop.f32.mrf.mxu0
        %591 = vdwg.mxu0
        %v592 = vsel %vm544, %v587, -inf
        %593 = vmax.xlane.f32.xlu0 %v592
        %v594 = vpop.xlane.xlu0 %593
        %v595 = vsub.f32 %v587, %v594
        %v596 = vmul.f32 %v595, 1.442695
        %v597 = vpow.pop %v596
        %v598 = vsel %vm544, %v597, 0.0
        %599 = vadd.xlane.f32.xlu0 %v598
        %v600 = vpop.xlane.xlu0 %599
        %v601 = vrcp.pop %v600
        %v602 = vmul.f32 %v600, %v601
        %v603 = vsub.f32 2.0, %v602
        %v604 = vmul.f32 %v601, %v603
        %v605 = vmul.f32 %v597, %v604
        %v606 = vpack.c.bf16 %v605, %v605
        %608 = vrot.lane.b32.xlu0 %v542, 64
        %v609 = vpop.permute.xlu0 %608
        %v611 = vsel %vm544, %v606, 0
        %v614 = vsel %vm548, %v609, 0
        %616 = vmatprep.subr.bf16.mxu0 0
        %617 = vmatpush1.bf16.msra.mxu0 0
        %618 = vmatprep.subr.bf16.mxu0 0
        %619 = vmatpush1.bf16.msra.mxu0 0
        %620 = vmatprep.subr.bf16.mxu0 0
        %621 = vmatpush1.bf16.msra.mxu0 0
        %622 = vmatprep.subr.bf16.mxu0 0
        %623 = vmatpush1.bf16.msra.mxu0 0
        %624 = vmatprep.subr.bf16.mxu0 0
        %625 = vmatpush1.bf16.msra.mxu0 0
        %626 = vmatprep.subr.bf16.mxu0 0
        %627 = vmatpush1.bf16.msra.mxu0 0
        %628 = vmatprep.subr.bf16.mxu0 0
        %629 = vmatpush1.bf16.msra.mxu0 0
        %630 = vmatprep.subr.bf16.mxu0 0
        %631 = vmatpush1.bf16.msra.mxu0 %v614
        %632 = vmatprep.subr.bf16.mxu0 0
        %633 = vmatpush2.bf16.msra.mxu0 0
        %634 = vmatprep.subr.bf16.mxu0 0
        %635 = vmatpush2.bf16.msra.mxu0 0
        %636 = vmatprep.subr.bf16.mxu0 0
        %637 = vmatpush2.bf16.msra.mxu0 0
        %638 = vmatprep.subr.bf16.mxu0 0
        %639 = vmatpush2.bf16.msra.mxu0 0
        %640 = vmatprep.subr.bf16.mxu0 0
        %641 = vmatpush2.bf16.msra.mxu0 0
        %642 = vmatprep.subr.bf16.mxu0 0
        %643 = vmatpush2.bf16.msra.mxu0 0
        %644 = vmatprep.subr.bf16.mxu0 0
        %645 = vmatpush2.bf16.msra.mxu0 0
        %646 = vmatprep.subr.bf16.mxu0 0
        %647 = vmatpush2.bf16.msra.mxu0 0
        %648 = vmatprep.mubr.bf16.mxu0 0
        %649 = vmatmul.mubr.bf16.gmra.mxu0 %v611
        %v650 = vpop.f32.mrf.mxu0
        %v651 = vadd.f32 0.0, %v650
        %v652 = vpop.f32.mrf.mxu0
        %v653 = vpop.f32.mrf.mxu0
        %v654 = vpop.f32.mrf.mxu0
        %655 = vdwg.mxu0
        %v656 = vpack.c.bf16 %v527, %v527
        %657 = vrot.lane.b32.xlu0 %v542, 120
        %v658 = vpop.permute.xlu0 %657
        %v660 = vsel %vm544, %v658, 0
        %v663 = vsel %vm548, %v656, 0
        %665 = vmatprep.subr.bf16.mxu0 0
        %666 = vmatpush1.bf16.msra.mxu0 0
        %667 = vmatprep.subr.bf16.mxu0 0
        %668 = vmatpush1.bf16.msra.mxu0 0
        %669 = vmatprep.subr.bf16.mxu0 0
        %670 = vmatpush1.bf16.msra.mxu0 0
        %671 = vmatprep.subr.bf16.mxu0 0
        %672 = vmatpush1.bf16.msra.mxu0 0
        %673 = vmatprep.subr.bf16.mxu0 0
        %674 = vmatpush1.bf16.msra.mxu0 0
        %675 = vmatprep.subr.bf16.mxu0 0
        %676 = vmatpush1.bf16.msra.mxu0 0
        %677 = vmatprep.subr.bf16.mxu0 0
        %678 = vmatpush1.bf16.msra.mxu0 0
        %679 = vmatprep.subr.bf16.mxu0 0
        %680 = vmatpush1.bf16.msra.mxu0 %v663
        %681 = vmatprep.subr.bf16.mxu0 0
        %682 = vmatpush2.bf16.msra.mxu0 0
        %683 = vmatprep.subr.bf16.mxu0 0
        %684 = vmatpush2.bf16.msra.mxu0 0
        %685 = vmatprep.subr.bf16.mxu0 0
        %686 = vmatpush2.bf16.msra.mxu0 0
        %687 = vmatprep.subr.bf16.mxu0 0
        %688 = vmatpush2.bf16.msra.mxu0 0
        %689 = vmatprep.subr.bf16.mxu0 0
        %690 = vmatpush2.bf16.msra.mxu0 0
        %691 = vmatprep.subr.bf16.mxu0 0
        %692 = vmatpush2.bf16.msra.mxu0 0
        %693 = vmatprep.subr.bf16.mxu0 0
        %694 = vmatpush2.bf16.msra.mxu0 0
        %695 = vmatprep.subr.bf16.mxu0 0
        %696 = vmatpush2.bf16.msra.mxu0 0
        %697 = vmatprep.mubr.bf16.mxu0 0
        %698 = vmatmul.mubr.bf16.gmra.mxu0 %v660
        %v699 = vpop.f32.mrf.mxu0
        %v700 = vadd.f32 0.0, %v699
        %v701 = vpop.f32.mrf.mxu0
        %v702 = vpop.f32.mrf.mxu0
        %v703 = vpop.f32.mrf.mxu0
        %704 = vdwg.mxu0
        %v705 = vsel %vm544, %v700, -inf
        %706 = vmax.xlane.f32.xlu0 %v705
        %v707 = vpop.xlane.xlu0 %706
        %v708 = vsub.f32 %v700, %v707
        %v709 = vmul.f32 %v708, 1.442695
        %v710 = vpow.pop %v709
        %v711 = vsel %vm544, %v710, 0.0
        %712 = vadd.xlane.f32.xlu0 %v711
        %v713 = vpop.xlane.xlu0 %712
        %v714 = vrcp.pop %v713
        %v715 = vmul.f32 %v713, %v714
        %v716 = vsub.f32 2.0, %v715
        %v717 = vmul.f32 %v714, %v716
        %v718 = vmul.f32 %v710, %v717
        %v719 = vpack.c.bf16 %v718, %v718
        %720 = vrot.lane.b32.xlu0 %v542, 56
        %v721 = vpop.permute.xlu0 %720
        %v723 = vsel %vm544, %v719, 0
        %v726 = vsel %vm548, %v721, 0
        %728 = vmatprep.subr.bf16.mxu0 0
        %729 = vmatpush1.bf16.msra.mxu0 0
        %730 = vmatprep.subr.bf16.mxu0 0
        %731 = vmatpush1.bf16.msra.mxu0 0
        %732 = vmatprep.subr.bf16.mxu0 0
        %733 = vmatpush1.bf16.msra.mxu0 0
        %734 = vmatprep.subr.bf16.mxu0 0
        %735 = vmatpush1.bf16.msra.mxu0 0
        %736 = vmatprep.subr.bf16.mxu0 0
        %737 = vmatpush1.bf16.msra.mxu0 0
        %738 = vmatprep.subr.bf16.mxu0 0
        %739 = vmatpush1.bf16.msra.mxu0 0
        %740 = vmatprep.subr.bf16.mxu0 0
        %741 = vmatpush1.bf16.msra.mxu0 0
        %742 = vmatprep.subr.bf16.mxu0 0
        %743 = vmatpush1.bf16.msra.mxu0 %v726
        %744 = vmatprep.subr.bf16.mxu0 0
        %745 = vmatpush2.bf16.msra.mxu0 0
        %746 = vmatprep.subr.bf16.mxu0 0
        %747 = vmatpush2.bf16.msra.mxu0 0
        %748 = vmatprep.subr.bf16.mxu0 0
        %749 = vmatpush2.bf16.msra.mxu0 0
        %750 = vmatprep.subr.bf16.mxu0 0
        %751 = vmatpush2.bf16.msra.mxu0 0
        %752 = vmatprep.subr.bf16.mxu0 0
        %753 = vmatpush2.bf16.msra.mxu0 0
        %754 = vmatprep.subr.bf16.mxu0 0
        %755 = vmatpush2.bf16.msra.mxu0 0
        %756 = vmatprep.subr.bf16.mxu0 0
        %757 = vmatpush2.bf16.msra.mxu0 0
        %758 = vmatprep.subr.bf16.mxu0 0
        %759 = vmatpush2.bf16.msra.mxu0 0
        %760 = vmatprep.mubr.bf16.mxu0 0
        %761 = vmatmul.mubr.bf16.gmra.mxu0 %v723
        %v762 = vpop.f32.mrf.mxu0
        %v763 = vadd.f32 0.0, %v762
        %v764 = vpop.f32.mrf.mxu0
        %v765 = vpop.f32.mrf.mxu0
        %v766 = vpop.f32.mrf.mxu0
        %767 = vdwg.mxu0
        %v768 = vpack.c.bf16 %v528, %v528
        %769 = vrot.lane.b32.xlu0 %v542, 112
        %v770 = vpop.permute.xlu0 %769
        %v772 = vsel %vm544, %v770, 0
        %v775 = vsel %vm548, %v768, 0
        %777 = vmatprep.subr.bf16.mxu0 0
        %778 = vmatpush1.bf16.msra.mxu0 0
        %779 = vmatprep.subr.bf16.mxu0 0
        %780 = vmatpush1.bf16.msra.mxu0 0
        %781 = vmatprep.subr.bf16.mxu0 0
        %782 = vmatpush1.bf16.msra.mxu0 0
        %783 = vmatprep.subr.bf16.mxu0 0
        %784 = vmatpush1.bf16.msra.mxu0 0
        %785 = vmatprep.subr.bf16.mxu0 0
        %786 = vmatpush1.bf16.msra.mxu0 0
        %787 = vmatprep.subr.bf16.mxu0 0
        %788 = vmatpush1.bf16.msra.mxu0 0
        %789 = vmatprep.subr.bf16.mxu0 0
        %790 = vmatpush1.bf16.msra.mxu0 0
        %791 = vmatprep.subr.bf16.mxu0 0
        %792 = vmatpush1.bf16.msra.mxu0 %v775
        %793 = vmatprep.subr.bf16.mxu0 0
        %794 = vmatpush2.bf16.msra.mxu0 0
        %795 = vmatprep.subr.bf16.mxu0 0
        %796 = vmatpush2.bf16.msra.mxu0 0
        %797 = vmatprep.subr.bf16.mxu0 0
        %798 = vmatpush2.bf16.msra.mxu0 0
        %799 = vmatprep.subr.bf16.mxu0 0
        %800 = vmatpush2.bf16.msra.mxu0 0
        %801 = vmatprep.subr.bf16.mxu0 0
        %802 = vmatpush2.bf16.msra.mxu0 0
        %803 = vmatprep.subr.bf16.mxu0 0
        %804 = vmatpush2.bf16.msra.mxu0 0
        %805 = vmatprep.subr.bf16.mxu0 0
        %806 = vmatpush2.bf16.msra.mxu0 0
        %807 = vmatprep.subr.bf16.mxu0 0
        %808 = vmatpush2.bf16.msra.mxu0 0
        %809 = vmatprep.mubr.bf16.mxu0 0
        %810 = vmatmul.mubr.bf16.gmra.mxu0 %v772
        %v811 = vpop.f32.mrf.mxu0
        %v812 = vadd.f32 0.0, %v811
        %v813 = vpop.f32.mrf.mxu0
        %v814 = vpop.f32.mrf.mxu0
        %v815 = vpop.f32.mrf.mxu0
        %816 = vdwg.mxu0
        %v817 = vsel %vm544, %v812, -inf
        %818 = vmax.xlane.f32.xlu0 %v817
        %v819 = vpop.xlane.xlu0 %818
        %v820 = vsub.f32 %v812, %v819
        %v821 = vmul.f32 %v820, 1.442695
        %v822 = vpow.pop %v821
        %v823 = vsel %vm544, %v822, 0.0
        %824 = vadd.xlane.f32.xlu0 %v823
        %v825 = vpop.xlane.xlu0 %824
        %v826 = vrcp.pop %v825
        %v827 = vmul.f32 %v825, %v826
        %v828 = vsub.f32 2.0, %v827
        %v829 = vmul.f32 %v826, %v828
        %v830 = vmul.f32 %v822, %v829
        %v831 = vpack.c.bf16 %v830, %v830
        %832 = vrot.lane.b32.xlu0 %v542, 48
        %v833 = vpop.permute.xlu0 %832
        %v835 = vsel %vm544, %v831, 0
        %v838 = vsel %vm548, %v833, 0
        %840 = vmatprep.subr.bf16.mxu0 0
        %841 = vmatpush1.bf16.msra.mxu0 0
        %842 = vmatprep.subr.bf16.mxu0 0
        %843 = vmatpush1.bf16.msra.mxu0 0
        %844 = vmatprep.subr.bf16.mxu0 0
        %845 = vmatpush1.bf16.msra.mxu0 0
        %846 = vmatprep.subr.bf16.mxu0 0
        %847 = vmatpush1.bf16.msra.mxu0 0
        %848 = vmatprep.subr.bf16.mxu0 0
        %849 = vmatpush1.bf16.msra.mxu0 0
        %850 = vmatprep.subr.bf16.mxu0 0
        %851 = vmatpush1.bf16.msra.mxu0 0
        %852 = vmatprep.subr.bf16.mxu0 0
        %853 = vmatpush1.bf16.msra.mxu0 0
        %854 = vmatprep.subr.bf16.mxu0 0
        %855 = vmatpush1.bf16.msra.mxu0 %v838
        %856 = vmatprep.subr.bf16.mxu0 0
        %857 = vmatpush2.bf16.msra.mxu0 0
        %858 = vmatprep.subr.bf16.mxu0 0
        %859 = vmatpush2.bf16.msra.mxu0 0
        %860 = vmatprep.subr.bf16.mxu0 0
        %861 = vmatpush2.bf16.msra.mxu0 0
        %862 = vmatprep.subr.bf16.mxu0 0
        %863 = vmatpush2.bf16.msra.mxu0 0
        %864 = vmatprep.subr.bf16.mxu0 0
        %865 = vmatpush2.bf16.msra.mxu0 0
        %866 = vmatprep.subr.bf16.mxu0 0
        %867 = vmatpush2.bf16.msra.mxu0 0
        %868 = vmatprep.subr.bf16.mxu0 0
        %869 = vmatpush2.bf16.msra.mxu0 0
        %870 = vmatprep.subr.bf16.mxu0 0
        %871 = vmatpush2.bf16.msra.mxu0 0
        %872 = vmatprep.mubr.bf16.mxu0 0
        %873 = vmatmul.mubr.bf16.gmra.mxu0 %v835
        %v874 = vpop.f32.mrf.mxu0
        %v875 = vadd.f32 0.0, %v874
        %v876 = vpop.f32.mrf.mxu0
        %v877 = vpop.f32.mrf.mxu0
        %v878 = vpop.f32.mrf.mxu0
        %879 = vdwg.mxu0
        %v880 = vpack.c.bf16 %v529, %v529
        %881 = vrot.lane.b32.xlu0 %v542, 104
        %v882 = vpop.permute.xlu0 %881
        %v884 = vsel %vm544, %v882, 0
        %v887 = vsel %vm548, %v880, 0
        %889 = vmatprep.subr.bf16.mxu0 0
        %890 = vmatpush1.bf16.msra.mxu0 0
        %891 = vmatprep.subr.bf16.mxu0 0
        %892 = vmatpush1.bf16.msra.mxu0 0
        %893 = vmatprep.subr.bf16.mxu0 0
        %894 = vmatpush1.bf16.msra.mxu0 0
        %895 = vmatprep.subr.bf16.mxu0 0
        %896 = vmatpush1.bf16.msra.mxu0 0
        %897 = vmatprep.subr.bf16.mxu0 0
        %898 = vmatpush1.bf16.msra.mxu0 0
        %899 = vmatprep.subr.bf16.mxu0 0
        %900 = vmatpush1.bf16.msra.mxu0 0
        %901 = vmatprep.subr.bf16.mxu0 0
        %902 = vmatpush1.bf16.msra.mxu0 0
        %903 = vmatprep.subr.bf16.mxu0 0
        %904 = vmatpush1.bf16.msra.mxu0 %v887
        %905 = vmatprep.subr.bf16.mxu0 0
        %906 = vmatpush2.bf16.msra.mxu0 0
        %907 = vmatprep.subr.bf16.mxu0 0
        %908 = vmatpush2.bf16.msra.mxu0 0
        %909 = vmatprep.subr.bf16.mxu0 0
        %910 = vmatpush2.bf16.msra.mxu0 0
        %911 = vmatprep.subr.bf16.mxu0 0
        %912 = vmatpush2.bf16.msra.mxu0 0
        %913 = vmatprep.subr.bf16.mxu0 0
        %914 = vmatpush2.bf16.msra.mxu0 0
        %915 = vmatprep.subr.bf16.mxu0 0
        %916 = vmatpush2.bf16.msra.mxu0 0
        %917 = vmatprep.subr.bf16.mxu0 0
        %918 = vmatpush2.bf16.msra.mxu0 0
        %919 = vmatprep.subr.bf16.mxu0 0
        %920 = vmatpush2.bf16.msra.mxu0 0
        %921 = vmatprep.mubr.bf16.mxu0 0
        %922 = vmatmul.mubr.bf16.gmra.mxu0 %v884
        %v923 = vpop.f32.mrf.mxu0
        %v924 = vadd.f32 0.0, %v923
        %v925 = vpop.f32.mrf.mxu0
        %v926 = vpop.f32.mrf.mxu0
        %v927 = vpop.f32.mrf.mxu0
        %928 = vdwg.mxu0
        %v929 = vsel %vm544, %v924, -inf
        %930 = vmax.xlane.f32.xlu0 %v929
        %v931 = vpop.xlane.xlu0 %930
        %v932 = vsub.f32 %v924, %v931
        %v933 = vmul.f32 %v932, 1.442695
        %v934 = vpow.pop %v933
        %v935 = vsel %vm544, %v934, 0.0
        %936 = vadd.xlane.f32.xlu0 %v935
        %v937 = vpop.xlane.xlu0 %936
        %v938 = vrcp.pop %v937
        %v939 = vmul.f32 %v937, %v938
        %v940 = vsub.f32 2.0, %v939
        %v941 = vmul.f32 %v938, %v940
        %v942 = vmul.f32 %v934, %v941
        %v943 = vpack.c.bf16 %v942, %v942
        %944 = vrot.lane.b32.xlu0 %v542, 40
        %v945 = vpop.permute.xlu0 %944
        %v947 = vsel %vm544, %v943, 0
        %v950 = vsel %vm548, %v945, 0
        %952 = vmatprep.subr.bf16.mxu0 0
        %953 = vmatpush1.bf16.msra.mxu0 0
        %954 = vmatprep.subr.bf16.mxu0 0
        %955 = vmatpush1.bf16.msra.mxu0 0
        %956 = vmatprep.subr.bf16.mxu0 0
        %957 = vmatpush1.bf16.msra.mxu0 0
        %958 = vmatprep.subr.bf16.mxu0 0
        %959 = vmatpush1.bf16.msra.mxu0 0
        %960 = vmatprep.subr.bf16.mxu0 0
        %961 = vmatpush1.bf16.msra.mxu0 0
        %962 = vmatprep.subr.bf16.mxu0 0
        %963 = vmatpush1.bf16.msra.mxu0 0
        %964 = vmatprep.subr.bf16.mxu0 0
        %965 = vmatpush1.bf16.msra.mxu0 0
        %966 = vmatprep.subr.bf16.mxu0 0
        %967 = vmatpush1.bf16.msra.mxu0 %v950
        %968 = vmatprep.subr.bf16.mxu0 0
        %969 = vmatpush2.bf16.msra.mxu0 0
        %970 = vmatprep.subr.bf16.mxu0 0
        %971 = vmatpush2.bf16.msra.mxu0 0
        %972 = vmatprep.subr.bf16.mxu0 0
        %973 = vmatpush2.bf16.msra.mxu0 0
        %974 = vmatprep.subr.bf16.mxu0 0
        %975 = vmatpush2.bf16.msra.mxu0 0
        %976 = vmatprep.subr.bf16.mxu0 0
        %977 = vmatpush2.bf16.msra.mxu0 0
        %978 = vmatprep.subr.bf16.mxu0 0
        %979 = vmatpush2.bf16.msra.mxu0 0
        %980 = vmatprep.subr.bf16.mxu0 0
        %981 = vmatpush2.bf16.msra.mxu0 0
        %982 = vmatprep.subr.bf16.mxu0 0
        %983 = vmatpush2.bf16.msra.mxu0 0
        %984 = vmatprep.mubr.bf16.mxu0 0
        %985 = vmatmul.mubr.bf16.gmra.mxu0 %v947
        %v986 = vpop.f32.mrf.mxu0
        %v987 = vadd.f32 0.0, %v986
        %v988 = vpop.f32.mrf.mxu0
        %v989 = vpop.f32.mrf.mxu0
        %v990 = vpop.f32.mrf.mxu0
        %991 = vdwg.mxu0
        %993 = vrot.lane.b32.xlu0 %v763, 8
        %v994 = vpop.permute.xlu0 %993
        %997 = vrot.lane.b32.xlu0 %v875, 16
        %v998 = vpop.permute.xlu0 %997
        %1001 = vrot.lane.b32.xlu0 %v987, 24
        %v1002 = vpop.permute.xlu0 %1001
        %v1004 = vsel %vm544, %v651, %v994
        %vm1005 = vcmask 130048
        %v1006 = vsel %vm1005, %v1004, %v998
        %vm1007 = vcmask 195584
        %v1008 = vsel %vm1007, %v1006, %v1002
        %v1009 = vpack.c.bf16 %v1008, %v1008
        %v1010 = vld [vmem:[%s3] sm:$0xf]
        %v1011 = vld [vmem:[%s3 + $0x4] sm:$0xf]
        %v1012 = vld [vmem:[%s3 + $0x8] sm:$0xf]
        %v1013 = vld [vmem:[%s3 + $0xc] sm:$0xf]
        %v1014 = vld [vmem:[%s4] sm:$0x1]
        %v1016 = vlaneseq
        %v1017 = vshrl.u32 %v1016, 7
        %v1018 = vsub.s32 0, %v1017
        %v1019 = vrot.slane %v1014, %v1018
        %v1025 = vunpack.c.l.b16 %v1010
        %v1026 = vunpack.c.l.b16 %v1011
        %v1027 = vunpack.c.l.b16 %v1012
        %v1028 = vunpack.c.l.b16 %v1013
        %v1029 = vpack.c.b16 %v1026, %v1025
        %v1030 = vpack.c.b16 %v1028, %v1027
        %v1034 = vsel %vm462, %v1009, 0
        %1036 = vmatprep.subr.bf16.mxu0 0
        %1037 = vmatpush1.bf16.msra.mxu0 0
        %1038 = vmatprep.subr.bf16.mxu0 0
        %1039 = vmatpush1.bf16.msra.mxu0 0
        %1040 = vmatprep.subr.bf16.mxu0 0
        %1041 = vmatpush1.bf16.msra.mxu0 0
        %1042 = vmatprep.subr.bf16.mxu0 0
        %1043 = vmatpush1.bf16.msra.mxu0 0
        %1044 = vmatprep.subr.bf16.mxu0 0
        %1045 = vmatpush1.bf16.msra.mxu0 0
        %1046 = vmatprep.subr.bf16.mxu0 0
        %1047 = vmatpush1.bf16.msra.mxu0 0
        %1048 = vmatprep.subr.bf16.mxu0 0
        %1049 = vmatpush1.bf16.msra.mxu0 %v1030
        %1050 = vmatprep.subr.bf16.mxu0 0
        %1051 = vmatpush1.bf16.msra.mxu0 %v1029
        %1052 = vmatprep.subr.bf16.mxu0 0
        %1053 = vmatpush2.bf16.msra.mxu0 0
        %1054 = vmatprep.subr.bf16.mxu0 0
        %1055 = vmatpush2.bf16.msra.mxu0 0
        %1056 = vmatprep.subr.bf16.mxu0 0
        %1057 = vmatpush2.bf16.msra.mxu0 0
        %1058 = vmatprep.subr.bf16.mxu0 0
        %1059 = vmatpush2.bf16.msra.mxu0 0
        %1060 = vmatprep.subr.bf16.mxu0 0
        %1061 = vmatpush2.bf16.msra.mxu0 0
        %1062 = vmatprep.subr.bf16.mxu0 0
        %1063 = vmatpush2.bf16.msra.mxu0 0
        %1064 = vmatprep.subr.bf16.mxu0 0
        %1065 = vmatpush2.bf16.msra.mxu0 0
        %1066 = vmatprep.subr.bf16.mxu0 0
        %1067 = vmatpush2.bf16.msra.mxu0 0
        %1068 = vmatprep.mubr.bf16.mxu0 0
        %1069 = vmatmul.mubr.bf16.gmra.mxu0 %v1034
        %v1070 = vpop.f32.mrf.mxu0
        %v1071 = vadd.f32 %v1019, %v1070
        %v1072 = vpop.f32.mrf.mxu0
        %v1073 = vpop.f32.mrf.mxu0
        %v1074 = vpop.f32.mrf.mxu0
        %1075 = vdwg.mxu0
        %v1076 = vadd.f32 %v437, %v1071
        %v1077 = vld [vmem:[%s5] sm:$0x1]
        %v1078 = vld [vmem:[%s6] sm:$0x1]
        %v1079 = vsel %vm462, %v1076, 0.0
        %1080 = vadd.xlane.f32.xlu0 %v1079
        %v1081 = vpop.xlane.xlu0 %1080
        %v1082 = vrcp.pop 32.0
        %v1083 = vmul.f32 %v1081, %v1082
        %v1084 = vsub.f32 %v1076, %v1083
        %v1085 = vmul.f32 %v1084, %v1084
        %v1086 = vsel %vm462, %v1085, 0.0
        %1087 = vadd.xlane.f32.xlu0 %v1086
        %v1088 = vpop.xlane.xlu0 %1087
        %v1089 = vmul.f32 %v1088, %v1082
        %v1090 = vadd.f32 %v1089, 1e-05
        %v1091 = vrsqrt.pop %v1090
        %v1092 = vmul.f32 %v1084, %v1091
        %v1094 = vlaneseq
        %v1095 = vshrl.u32 %v1094, 7
        %v1096 = vsub.s32 0, %v1095
        %v1097 = vrot.slane %v1077, %v1096
        %v1099 = vmul.f32 %v1092, %v1097
        %v1101 = vlaneseq
        %v1102 = vshrl.u32 %v1101, 7
        %v1103 = vsub.s32 0, %v1102
        %v1104 = vrot.slane %v1078, %v1103
        %v1106 = vadd.f32 %v1099, %v1104
        %v1107 = vpack.c.bf16 %v1106, %v1106
        %v1108 = vld [vmem:[%s7] sm:$0xf]
        %v1109 = vld [vmem:[%s7 + $0x4] sm:$0xf]
        %v1110 = vld [vmem:[%s7 + $0x8] sm:$0xf]
        %v1111 = vld [vmem:[%s7 + $0xc] sm:$0xf]
        %v1112 = vld [vmem:[%s8] sm:$0x1]
        %v1114 = vlaneseq
        %v1115 = vshrl.u32 %v1114, 7
        %v1116 = vsub.s32 0, %v1115
        %v1117 = vrot.slane %v1112, %v1116
        %v1123 = vunpack.c.l.b16 %v1108
        %v1124 = vunpack.c.l.b16 %v1109
        %v1125 = vunpack.c.l.b16 %v1110
        %v1126 = vunpack.c.l.b16 %v1111
        %v1127 = vpack.c.b16 %v1124, %v1123
        %v1128 = vpack.c.b16 %v1126, %v1125
        %v1132 = vsel %vm462, %v1107, 0
        %1134 = vmatprep.subr.bf16.mxu0 0
        %1135 = vmatpush1.bf16.msra.mxu0 0
        %1136 = vmatprep.subr.bf16.mxu0 0
        %1137 = vmatpush1.bf16.msra.mxu0 0
        %1138 = vmatprep.subr.bf16.mxu0 0
        %1139 = vmatpush1.bf16.msra.mxu0 0
        %1140 = vmatprep.subr.bf16.mxu0 0
        %1141 = vmatpush1.bf16.msra.mxu0 0
        %1142 = vmatprep.subr.bf16.mxu0 0
        %1143 = vmatpush1.bf16.msra.mxu0 0
        %1144 = vmatprep.subr.bf16.mxu0 0
        %1145 = vmatpush1.bf16.msra.mxu0 0
        %1146 = vmatprep.subr.bf16.mxu0 0
        %1147 = vmatpush1.bf16.msra.mxu0 %v1128
        %1148 = vmatprep.subr.bf16.mxu0 0
        %1149 = vmatpush1.bf16.msra.mxu0 %v1127
        %1150 = vmatprep.subr.bf16.mxu0 0
        %1151 = vmatpush2.bf16.msra.mxu0 0
        %1152 = vmatprep.subr.bf16.mxu0 0
        %1153 = vmatpush2.bf16.msra.mxu0 0
        %1154 = vmatprep.subr.bf16.mxu0 0
        %1155 = vmatpush2.bf16.msra.mxu0 0
        %1156 = vmatprep.subr.bf16.mxu0 0
        %1157 = vmatpush2.bf16.msra.mxu0 0
        %1158 = vmatprep.subr.bf16.mxu0 0
        %1159 = vmatpush2.bf16.msra.mxu0 0
        %1160 = vmatprep.subr.bf16.mxu0 0
        %1161 = vmatpush2.bf16.msra.mxu0 0
        %1162 = vmatprep.subr.bf16.mxu0 0
        %1163 = vmatpush2.bf16.msra.mxu0 0
        %1164 = vmatprep.subr.bf16.mxu0 0
        %1165 = vmatpush2.bf16.msra.mxu0 0
        %1166 = vmatprep.mubr.bf16.mxu0 0
        %1167 = vmatmul.mubr.bf16.gmra.mxu0 %v1132
        %v1168 = vpop.f32.mrf.mxu0
        %v1169 = vadd.f32 %v1117, %v1168
        %v1170 = vpop.f32.mrf.mxu0
        %v1171 = vpop.f32.mrf.mxu0
        %v1172 = vpop.f32.mrf.mxu0
        %1173 = vdwg.mxu0
        %v1174 = vmax.f32 %v1169, 0.0
        %v1175 = vpack.c.bf16 %v1174, %v1174
        %v1176 = vld [vmem:[%s9] sm:$0xf]
        %v1177 = vld [vmem:[%s9 + $0x4] sm:$0xf]
        %v1178 = vld [vmem:[%s9 + $0x8] sm:$0xf]
        %v1179 = vld [vmem:[%s9 + $0xc] sm:$0xf]
        %v1180 = vld [vmem:[%s9 + $0x10] sm:$0xf]
        %v1181 = vld [vmem:[%s9 + $0x14] sm:$0xf]
        %v1182 = vld [vmem:[%s9 + $0x18] sm:$0xf]
        %v1183 = vld [vmem:[%s9 + $0x1c] sm:$0xf]
        %v1184 = vld [vmem:[%s9 + $0x20] sm:$0xf]
        %v1185 = vld [vmem:[%s9 + $0x24] sm:$0xf]
        %v1186 = vld [vmem:[%s9 + $0x28] sm:$0xf]
        %v1187 = vld [vmem:[%s9 + $0x2c] sm:$0xf]
        %v1188 = vld [vmem:[%s9 + $0x30] sm:$0xf]
        %v1189 = vld [vmem:[%s9 + $0x34] sm:$0xf]
        %v1190 = vld [vmem:[%s9 + $0x38] sm:$0xf]
        %v1191 = vld [vmem:[%s9 + $0x3c] sm:$0xf]
        %v1192 = vld [vmem:[%s10] sm:$0x1]
        %v1194 = vlaneseq
        %v1195 = vshrl.u32 %v1194, 7
        %v1196 = vsub.s32 0, %v1195
        %v1197 = vrot.slane %v1192, %v1196
        %v1215 = vunpack.c.l.b16 %v1176
        %v1216 = vunpack.c.l.b16 %v1177
        %v1217 = vunpack.c.l.b16 %v1178
        %v1218 = vunpack.c.l.b16 %v1179
        %v1219 = vunpack.c.l.b16 %v1180
        %v1220 = vunpack.c.l.b16 %v1181
        %v1221 = vunpack.c.l.b16 %v1182
        %v1222 = vunpack.c.l.b16 %v1183
        %v1223 = vunpack.c.l.b16 %v1184
        %v1224 = vunpack.c.l.b16 %v1185
        %v1225 = vunpack.c.l.b16 %v1186
        %v1226 = vunpack.c.l.b16 %v1187
        %v1227 = vunpack.c.l.b16 %v1188
        %v1228 = vunpack.c.l.b16 %v1189
        %v1229 = vunpack.c.l.b16 %v1190
        %v1230 = vunpack.c.l.b16 %v1191
        %v1231 = vpack.c.b16 %v1216, %v1215
        %v1232 = vpack.c.b16 %v1218, %v1217
        %v1233 = vpack.c.b16 %v1220, %v1219
        %v1234 = vpack.c.b16 %v1222, %v1221
        %v1235 = vpack.c.b16 %v1224, %v1223
        %v1236 = vpack.c.b16 %v1226, %v1225
        %v1237 = vpack.c.b16 %v1228, %v1227
        %v1238 = vpack.c.b16 %v1230, %v1229
        %1247 = vmatprep.subr.bf16.mxu0 0
        %1248 = vmatpush1.bf16.msra.mxu0 %v1238
        %1249 = vmatprep.subr.bf16.mxu0 0
        %1250 = vmatpush1.bf16.msra.mxu0 %v1237
        %1251 = vmatprep.subr.bf16.mxu0 0
        %1252 = vmatpush1.bf16.msra.mxu0 %v1236
        %1253 = vmatprep.subr.bf16.mxu0 0
        %1254 = vmatpush1.bf16.msra.mxu0 %v1235
        %1255 = vmatprep.subr.bf16.mxu0 0
        %1256 = vmatpush1.bf16.msra.mxu0 %v1234
        %1257 = vmatprep.subr.bf16.mxu0 0
        %1258 = vmatpush1.bf16.msra.mxu0 %v1233
        %1259 = vmatprep.subr.bf16.mxu0 0
        %1260 = vmatpush1.bf16.msra.mxu0 %v1232
        %1261 = vmatprep.subr.bf16.mxu0 0
        %1262 = vmatpush1.bf16.msra.mxu0 %v1231
        %1263 = vmatprep.subr.bf16.mxu0 0
        %1264 = vmatpush2.bf16.msra.mxu0 0
        %1265 = vmatprep.subr.bf16.mxu0 0
        %1266 = vmatpush2.bf16.msra.mxu0 0
        %1267 = vmatprep.subr.bf16.mxu0 0
        %1268 = vmatpush2.bf16.msra.mxu0 0
        %1269 = vmatprep.subr.bf16.mxu0 0
        %1270 = vmatpush2.bf16.msra.mxu0 0
        %1271 = vmatprep.subr.bf16.mxu0 0
        %1272 = vmatpush2.bf16.msra.mxu0 0
        %1273 = vmatprep.subr.bf16.mxu0 0
        %1274 = vmatpush2.bf16.msra.mxu0 0
        %1275 = vmatprep.subr.bf16.mxu0 0
        %1276 = vmatpush2.bf16.msra.mxu0 0
        %1277 = vmatprep.subr.bf16.mxu0 0
        %1278 = vmatpush2.bf16.msra.mxu0 0
        %1279 = vmatprep.mubr.bf16.mxu0 0
        %1280 = vmatmul.mubr.bf16.gmra.mxu0 %v1175
        %v1281 = vpop.f32.mrf.mxu0
        %v1282 = vadd.f32 %v1197, %v1281
        %v1283 = vpop.f32.mrf.mxu0
        %v1284 = vpop.f32.mrf.mxu0
        %v1285 = vpop.f32.mrf.mxu0
        %1286 = vdwg.mxu0
        %v1287 = vadd.f32 %v1106, %v1282
        %v1288 = vld [vmem:[%s11] sm:$0x1]
        %v1289 = vld [vmem:[%s12] sm:$0x1]
        %v1290 = vsel %vm462, %v1287, 0.0
        %1291 = vadd.xlane.f32.xlu0 %v1290
        %v1292 = vpop.xlane.xlu0 %1291
        %v1293 = vmul.f32 %v1292, %v1082
        %v1294 = vsub.f32 %v1287, %v1293
        %v1295 = vmul.f32 %v1294, %v1294
        %v1296 = vsel %vm462, %v1295, 0.0
        %1297 = vadd.xlane.f32.xlu0 %v1296
        %v1298 = vpop.xlane.xlu0 %1297
        %v1299 = vmul.f32 %v1298, %v1082
        %v1300 = vadd.f32 %v1299, 1e-05
        %v1301 = vrsqrt.pop %v1300
        %v1302 = vmul.f32 %v1294, %v1301
        %v1304 = vlaneseq
        %v1305 = vshrl.u32 %v1304, 7
        %v1306 = vsub.s32 0, %v1305
        %v1307 = vrot.slane %v1288, %v1306
        %v1309 = vmul.f32 %v1302, %v1307
        %v1311 = vlaneseq
        %v1312 = vshrl.u32 %v1311, 7
        %v1313 = vsub.s32 0, %v1312
        %v1314 = vrot.slane %v1289, %v1313
        %v1316 = vadd.f32 %v1309, %v1314
        %1317 = vst.msk [vmem:[%s431] sm:$0xff] %vm462, %v1316
        %s1318 = sand.u32 %s313, 1
        %s1319 = scalar_lea.sflag [#allocation3], %s1318
        %s1320 = sand.u32 %s313, 1
        %s1321 = smul.addr %s1320, 8
        %s1322 = scalar_lea.vmem [#allocation2], %s1321
        // Predicated region
        $region73: #{tpu_custom_call.1} parent=71 // pred_check
          %p1323 = pneg %p323
        $region74: #{tpu_custom_call.1} parent=71 // pred_check_branch
          %1325 = sbr.rel (%p1323) target = $region76
        $region75: #{tpu_custom_call.1} parent=71 // pred_region
          %s1327 = ssub.s32 128, 128
          %1328 = vsyncadd %s1319, %s1327
          %s1329 = smul.addr %s27, 128
          %s1330 = scalar_lea.hbm %s13, %s1329
          %s1332 = sshll.u32 %s1322, 4
          %s1333 = int_to_ptr.vmem [resolvable:$true] %s1332
          %1335 = dma.vmem_to_hbm [thread:$0]  %s1333, 128, %s1330, %s1319
        $region76: #{tpu_custom_call.1} parent=71 // pred_fallthru
          _
      $region72: #{tpu_custom_call.1} parent=5 // pred_fallthru
        _
      %p1336 = scmp.le.s32.totalorder 2, %s22
      // Predicated region
      $region77: #{tpu_custom_call.1} parent=5 // pred_check
        %p1337 = pneg %p1336
      $region78: #{tpu_custom_call.1} parent=5 // pred_check_branch
        %1339 = sbr.rel (%p1337) target = $region80
      $region79: #{tpu_custom_call.1} parent=5 // pred_region
        %s1340 = ssub.s32 %s22, 2
        // Predicated region
        $region81: #{tpu_custom_call.1} parent=79 // pred_check
          %p1341 = pneg %p329
        $region82: #{tpu_custom_call.1} parent=79 // pred_check_branch
          %1343 = sbr.rel (%p1341) target = $region84
        $region83: #{tpu_custom_call.1} parent=79 // pred_region
          %s1344 = sand.u32 %s314, 1
          %s1345 = scalar_lea.sflag [#allocation3], %s1344
          %s1346 = sand.u32 %s314, 1
          %s1347 = smul.addr %s1346, 8
          %s1348 = scalar_lea.vmem [#allocation2], %s1347
          %1349 = dma.done %s1345, 128
        $region84: #{tpu_custom_call.1} parent=79 // pred_fallthru
          _
      $region80: #{tpu_custom_call.1} parent=5 // pred_fallthru
        _
    $region6: #{tpu_custom_call.1} parent=1 // loop_footer
      %s26 = sadd.s32 1, %s22
    $region7: #{tpu_custom_call.1} parent=1 // loop_footer_branch
      %21 = sbr.rel target = $region3
    $region8: #{tpu_custom_call.1} parent=1 // loop_exit
      _
    %1350 = vsyncpa [#allocation3], 1
    %s1351 = scalar_lea.sflag [#allocation3], 1
    %1352 = vsyncpa %s1351, 1

</llo_original>
